<compile_context>
chip_gen: v5e
topology: v5e:2x2
jax: 0.10.0
libtpu: 0.0.40
codegen_flags: <defaults>
</compile_context>

<pallas_src>
import math
import functools

import jax
import jax.numpy as jnp
from jax import lax
from jax.experimental import pallas as pl
from jax.experimental.pallas import tpu as pltpu


MATMUL_DTYPE = jnp.bfloat16   # MXU operand dtype; accumulation is always float32
LN_EPS = 1e-5                 # nn.LayerNorm default


def _round_up(x, m):
    return (x + m - 1) // m * m


def _full_spec(arr):
    """BlockSpec covering the whole (small) array; same block every grid step,
    so Pallas keeps it resident in VMEM (no per-step re-DMA)."""
    shape = arr.shape
    zeros = (0,) * len(shape)
    return pl.BlockSpec(shape, lambda *_: zeros)


# ----------------------------------------------------------------------------
# In-kernel helpers
# ----------------------------------------------------------------------------

def _layer_norm(x, g, b):
    mean = jnp.mean(x, axis=-1, keepdims=True)
    var = jnp.mean(jnp.square(x - mean), axis=-1, keepdims=True)  # biased, like nn.LayerNorm
    return (x - mean) * lax.rsqrt(var + LN_EPS) * g + b            # rsqrt -> EUP slot


def _attend(q, k, v, bias, num_heads, scr):
    """q: (Sq, D) bf16, k/v: (Sk, D) bf16, bias: (Sq, Sk) f32 additive.
    1/sqrt(Dh) is already folded into the Q projection.  Each head result is
    stored directly into its lane slice of the f32 VMEM scratch `scr`."""
    D = q.shape[-1]
    Dh = D // num_heads
    for h in range(num_heads):                       # static unroll over heads
        sl = slice(h * Dh, (h + 1) * Dh)
        # Contract on the feature dim directly -- no explicit K transpose.
        s = lax.dot_general(q[:, sl], k[:, sl], (((1,), (1,)), ((), ())),
                            preferred_element_type=jnp.float32)
        s = s + bias
        s = s - jnp.max(s, axis=-1, keepdims=True)
        e = jnp.exp(s)
        p = e * pl.reciprocal(jnp.sum(e, axis=-1, keepdims=True), approx=True)
        scr[:, sl] = jnp.dot(p.astype(MATMUL_DTYPE), v[:, sl],
                             preferred_element_type=jnp.float32)
    return scr[...]                                  # (Sq, D) f32


# ----------------------------------------------------------------------------
# Fused encoder layer: one pallas_call per layer, one grid step per batch
# ----------------------------------------------------------------------------

def _encoder_layer_kernel(x_ref, bias_ref,
                          w_qkv_ref, b_qkv_ref, w_o_ref, b_o_ref,
                          ln1_g_ref, ln1_b_ref,
                          w1_ref, b1_ref, w2_ref, b2_ref,
                          ln2_g_ref, ln2_b_ref,
                          o_ref, attn_scr, *, num_heads):
    x = x_ref[...].astype(jnp.float32)                    # (S, D)
    bias = bias_ref[...]                                  # (S, S), additive f32
    D = x.shape[-1]

    # Fused QKV projection (single MXU dot, full-K block, no accumulator).
    qkv = (jnp.dot(x.astype(MATMUL_DTYPE), w_qkv_ref[...],
                   preferred_element_type=jnp.float32) + b_qkv_ref[...])
    qkv = qkv.astype(MATMUL_DTYPE)
    attn = _attend(qkv[:, :D], qkv[:, D:2 * D], qkv[:, 2 * D:],
                   bias, num_heads, attn_scr)
    attn = (jnp.dot(attn.astype(MATMUL_DTYPE), w_o_ref[...],
                    preferred_element_type=jnp.float32) + b_o_ref[...])
    x1 = _layer_norm(x + attn, ln1_g_ref[...], ln1_b_ref[...])

    h = jnp.dot(x1.astype(MATMUL_DTYPE), w1_ref[...],
                preferred_element_type=jnp.float32) + b1_ref[...]
    h = jnp.maximum(h, 0.0)
    ff = jnp.dot(h.astype(MATMUL_DTYPE), w2_ref[...],
                 preferred_element_type=jnp.float32) + b2_ref[...]
    out = _layer_norm(x1 + ff, ln2_g_ref[...], ln2_b_ref[...])
    o_ref[...] = out.astype(o_ref.dtype)


def encoder_layer(p, x, bias, num_heads):
    B, S, D = x.shape
    weights = [p["w_qkv"], p["b_qkv"], p["w_o"], p["b_o"],
               p["ln1_g"], p["ln1_b"],
               p["w1"], p["b1"], p["w2"], p["b2"],
               p["ln2_g"], p["ln2_b"]]
    in_specs = [pl.BlockSpec((None, S, D), lambda b: (b, 0, 0)),
                pl.BlockSpec((None, S, S), lambda b: (b, 0, 0))]
    in_specs += [_full_spec(w) for w in weights]
    return pl.pallas_call(
        functools.partial(_encoder_layer_kernel, num_heads=num_heads),
        out_shape=jax.ShapeDtypeStruct((B, S, D), x.dtype),
        grid=(B,),
        in_specs=in_specs,
        out_specs=pl.BlockSpec((None, S, D), lambda b: (b, 0, 0)),
        scratch_shapes=[pltpu.VMEM((S, D), jnp.float32)],
        compiler_params=pltpu.CompilerParams(
            dimension_semantics=("parallel",)),
    )(x, bias, *weights)


# ----------------------------------------------------------------------------
# Fused decoder layer (masked self-attn + cross-attn + FFN) in one pallas_call
# ----------------------------------------------------------------------------

def _decoder_layer_kernel(x_ref, enc_ref, tgt_bias_ref, src_bias_ref,
                          sa_wqkv_ref, sa_bqkv_ref, sa_wo_ref, sa_bo_ref,
                          ln1_g_ref, ln1_b_ref,
                          ca_wq_ref, ca_bq_ref, ca_wkv_ref, ca_bkv_ref,
                          ca_wo_ref, ca_bo_ref, ln2_g_ref, ln2_b_ref,
                          w1_ref, b1_ref, w2_ref, b2_ref,
                          ln3_g_ref, ln3_b_ref,
                          o_ref, attn_scr, *, num_heads):
    x = x_ref[...].astype(jnp.float32)                    # (St, D)
    enc = enc_ref[...].astype(MATMUL_DTYPE)               # (Ss, D)
    D = x.shape[-1]

    # Masked self-attention.
    qkv = (jnp.dot(x.astype(MATMUL_DTYPE), sa_wqkv_ref[...],
                   preferred_element_type=jnp.float32)
           + sa_bqkv_ref[...]).astype(MATMUL_DTYPE)
    sa = _attend(qkv[:, :D], qkv[:, D:2 * D], qkv[:, 2 * D:],
                 tgt_bias_ref[...], num_heads, attn_scr)
    sa = jnp.dot(sa.astype(MATMUL_DTYPE), sa_wo_ref[...],
                 preferred_element_type=jnp.float32) + sa_bo_ref[...]
    x1 = _layer_norm(x + sa, ln1_g_ref[...], ln1_b_ref[...])

    # Cross-attention with the encoder output (fused KV projection).
    q = (jnp.dot(x1.astype(MATMUL_DTYPE), ca_wq_ref[...],
                 preferred_element_type=jnp.float32)
         + ca_bq_ref[...]).astype(MATMUL_DTYPE)
    kv = (jnp.dot(enc, ca_wkv_ref[...],
                  preferred_element_type=jnp.float32)
          + ca_bkv_ref[...]).astype(MATMUL_DTYPE)
    ca = _attend(q, kv[:, :D], kv[:, D:], src_bias_ref[...], num_heads, attn_scr)
    ca = jnp.dot(ca.astype(MATMUL_DTYPE), ca_wo_ref[...],
                 preferred_element_type=jnp.float32) + ca_bo_ref[...]
    x2 = _layer_norm(x1 + ca, ln2_g_ref[...], ln2_b_ref[...])

    # Feed-forward.
    h = jnp.dot(x2.astype(MATMUL_DTYPE), w1_ref[...],
                preferred_element_type=jnp.float32) + b1_ref[...]
    h = jnp.maximum(h, 0.0)
    ff = jnp.dot(h.astype(MATMUL_DTYPE), w2_ref[...],
                 preferred_element_type=jnp.float32) + b2_ref[...]
    out = _layer_norm(x2 + ff, ln3_g_ref[...], ln3_b_ref[...])
    o_ref[...] = out.astype(o_ref.dtype)


def decoder_layer(p, x, enc_out, tgt_bias, src_bias, num_heads):
    B, St, D = x.shape
    Ss = enc_out.shape[1]
    weights = [p["sa_w_qkv"], p["sa_b_qkv"], p["sa_w_o"], p["sa_b_o"],
               p["ln1_g"], p["ln1_b"],
               p["ca_w_q"], p["ca_b_q"], p["ca_w_kv"], p["ca_b_kv"],
               p["ca_w_o"], p["ca_b_o"], p["ln2_g"], p["ln2_b"],
               p["w1"], p["b1"], p["w2"], p["b2"],
               p["ln3_g"], p["ln3_b"]]
    in_specs = [pl.BlockSpec((None, St, D), lambda b: (b, 0, 0)),
                pl.BlockSpec((None, Ss, D), lambda b: (b, 0, 0)),
                pl.BlockSpec((None, St, St), lambda b: (b, 0, 0)),
                pl.BlockSpec((None, St, Ss), lambda b: (b, 0, 0))]
    in_specs += [_full_spec(w) for w in weights]
    return pl.pallas_call(
        functools.partial(_decoder_layer_kernel, num_heads=num_heads),
        out_shape=jax.ShapeDtypeStruct((B, St, D), x.dtype),
        grid=(B,),
        in_specs=in_specs,
        out_specs=pl.BlockSpec((None, St, D), lambda b: (b, 0, 0)),
        scratch_shapes=[pltpu.VMEM((St, D), jnp.float32)],
        compiler_params=pltpu.CompilerParams(
            dimension_semantics=("parallel",)),
    )(x, enc_out, tgt_bias, src_bias, *weights)


# ----------------------------------------------------------------------------
# Output vocab projection: single full-K dot per (M, N) tile, no accumulator
# ----------------------------------------------------------------------------

def _linear_kernel(x_ref, w_ref, b_ref, o_ref):
    o_ref[...] = (jnp.dot(x_ref[...].astype(MATMUL_DTYPE), w_ref[...],
                          preferred_element_type=jnp.float32)
                  + b_ref[...]).astype(o_ref.dtype)


def output_linear(x, w_padded, b_padded, n_out):
    """x: (B, S, D) f32; w_padded: (D, Np) bf16 lane-padded offline; b: (1, Np) f32."""
    B, S, D = x.shape
    M = B * S
    x2 = x.reshape(M, D)
    Mp = _round_up(M, 8)
    if Mp != M:
        x2 = jnp.pad(x2, ((0, Mp - M), (0, 0)))
    Np = w_padded.shape[1]

    # Expose >=2 parallel blocks along M when possible (keeps both v7x TCs busy).
    tm = Mp // 2 if (Mp >= 16 and (Mp // 2) % 8 == 0) else Mp
    tn = min(Np, 512)
    grid = (Mp // tm, Np // tn)

    out = pl.pallas_call(
        _linear_kernel,
        out_shape=jax.ShapeDtypeStruct((Mp, Np), jnp.float32),
        grid=grid,
        in_specs=[pl.BlockSpec((tm, D), lambda i, j: (i, 0)),
                  pl.BlockSpec((D, tn), lambda i, j: (0, j)),
                  pl.BlockSpec((1, tn), lambda i, j: (0, j))],
        out_specs=pl.BlockSpec((tm, tn), lambda i, j: (i, j)),
        compiler_params=pltpu.CompilerParams(
            dimension_semantics=("parallel", "parallel")),
    )(x2, w_padded, b_padded)
    return out[:M, :n_out].reshape(B, S, n_out)


# ----------------------------------------------------------------------------
# Transformer forward (eval mode), JAX glue around the fused layer kernels
# ----------------------------------------------------------------------------

def positional_encoding(max_len, d_model):
    pos = jnp.arange(max_len, dtype=jnp.float32)[:, None]
    div = jnp.exp(jnp.arange(0, d_model, 2, dtype=jnp.float32)
                  * (-math.log(10000.0) / d_model))
    pe = jnp.zeros((max_len, d_model), jnp.float32)
    pe = pe.at[:, 0::2].set(jnp.sin(pos * div))
    pe = pe.at[:, 1::2].set(jnp.cos(pos * div))
    return pe


def make_attn_bias(mask, B, Sq, Sk):
    """PyTorch-style 0/1 mask broadcastable to (B,1,Sq,Sk) -> additive f32 bias."""
    if mask is None:
        return jnp.zeros((B, Sq, Sk), jnp.float32)
    m = jnp.broadcast_to(mask.astype(jnp.float32), (B, 1, Sq, Sk))[:, 0]
    return jnp.where(m > 0.5, 0.0, -1e9).astype(jnp.float32)


def encoder_forward(p, src, src_mask, cfg):
    d_model = cfg["d_model"]
    B, S = src.shape
    x = jnp.take(p["embed"], src, axis=0) * math.sqrt(d_model)   # embedding (glue)
    x = x + p["pe"][:S][None, :, :]
    bias = make_attn_bias(src_mask, B, S, S)
    for lp in p["layers"]:
        x = encoder_layer(lp, x, bias, cfg["num_heads"])
    return x


def decoder_forward(p, tgt, enc_out, tgt_mask, src_mask, cfg):
    d_model = cfg["d_model"]
    B, St = tgt.shape
    Ss = enc_out.shape[1]
    x = jnp.take(p["embed"], tgt, axis=0) * math.sqrt(d_model)
    x = x + p["pe"][:St][None, :, :]
    tgt_bias = make_attn_bias(tgt_mask, B, St, St)
    src_bias = make_attn_bias(src_mask, B, St, Ss)
    for lp in p["layers"]:
        x = decoder_layer(lp, x, enc_out, tgt_bias, src_bias, cfg["num_heads"])
    return x


def transformer_forward(params, src, tgt, src_mask, tgt_mask, cfg):
    enc_out = encoder_forward(params["encoder"], src, src_mask, cfg)
    dec_out = decoder_forward(params["decoder"], tgt, enc_out, tgt_mask, src_mask, cfg)
    return output_linear(dec_out, params["out_w"], params["out_b"], cfg["tgt_vocab"])


# ----------------------------------------------------------------------------
# Parameter init (raw, PyTorch-like) + offline prep (fusion / bf16 / padding)
# ----------------------------------------------------------------------------

def init_raw_params(key, cfg):
    d_model, d_ff = cfg["d_model"], cfg["d_ff"]
    keys = iter(jax.random.split(key, 1024))

    def w(shape):
        return jax.random.normal(next(keys), shape, jnp.float32) * 0.02

    def mha():
        return {"wq": w((d_model, d_model)), "bq": jnp.zeros((d_model,), jnp.float32),
                "wk": w((d_model, d_model)), "bk": jnp.zeros((d_model,), jnp.float32),
                "wv": w((d_model, d_model)), "bv": jnp.zeros((d_model,), jnp.float32),
                "wo": w((d_model, d_model)), "bo": jnp.zeros((d_model,), jnp.float32)}

    def ffn():
        return {"w1": w((d_model, d_ff)), "b1": jnp.zeros((d_ff,), jnp.float32),
                "w2": w((d_ff, d_model)), "b2": jnp.zeros((d_model,), jnp.float32)}

    def ln():
        return jnp.ones((d_model,), jnp.float32), jnp.zeros((d_model,), jnp.float32)

    def enc_layer():
        g1, b1 = ln(); g2, b2 = ln()
        return {"self_attn": mha(), "ln1_g": g1, "ln1_b": b1,
                "ff": ffn(), "ln2_g": g2, "ln2_b": b2}

    def dec_layer():
        g1, b1 = ln(); g2, b2 = ln(); g3, b3 = ln()
        return {"self_attn": mha(), "ln1_g": g1, "ln1_b": b1,
                "cross_attn": mha(), "ln2_g": g2, "ln2_b": b2,
                "ff": ffn(), "ln3_g": g3, "ln3_b": b3}

    pe = positional_encoding(cfg["max_len"], d_model)
    return {
        "encoder": {"embed": w((cfg["src_vocab"], d_model)), "pe": pe,
                    "layers": [enc_layer() for _ in range(cfg["num_layers"])]},
        "decoder": {"embed": w((cfg["tgt_vocab"], d_model)), "pe": pe,
                    "layers": [dec_layer() for _ in range(cfg["num_layers"])]},
        "out_w": w((d_model, cfg["tgt_vocab"])),
        "out_b": jnp.zeros((cfg["tgt_vocab"],), jnp.float32),
    }


def prepare_params(raw, cfg):
    """Offline prep, hoisted out of the hot path: fuse QKV/KV projections,
    fold 1/sqrt(Dh) into Wq/bq, cast matmul weights to bf16, reshape biases/LN
    params to (1, N), lane-pad the output projection to a multiple of 128."""
    Dh = cfg["d_model"] // cfg["num_heads"]
    scale = 1.0 / math.sqrt(Dh)

    def row(v):
        return v.reshape(1, -1).astype(jnp.float32)

    def prep_self(p):
        return {"w_qkv": jnp.concatenate([p["wq"] * scale, p["wk"], p["wv"]],
                                         axis=1).astype(MATMUL_DTYPE),
                "b_qkv": row(jnp.concatenate([p["bq"] * scale, p["bk"], p["bv"]])),
                "w_o": p["wo"].astype(MATMUL_DTYPE), "b_o": row(p["bo"])}

    def prep_cross(p):
        return {"w_q": (p["wq"] * scale).astype(MATMUL_DTYPE),
                "b_q": row(p["bq"] * scale),
                "w_kv": jnp.concatenate([p["wk"], p["wv"]],
                                        axis=1).astype(MATMUL_DTYPE),
                "b_kv": row(jnp.concatenate([p["bk"], p["bv"]])),
                "w_o": p["wo"].astype(MATMUL_DTYPE), "b_o": row(p["bo"])}

    def prep_ffn(p):
        return {"w1": p["w1"].astype(MATMUL_DTYPE), "b1": row(p["b1"]),
                "w2": p["w2"].astype(MATMUL_DTYPE), "b2": row(p["b2"])}

    def prep_enc_layer(lp):
        sa, ff = prep_self(lp["self_attn"]), prep_ffn(lp["ff"])
        return {"w_qkv": sa["w_qkv"], "b_qkv": sa["b_qkv"],
                "w_o": sa["w_o"], "b_o": sa["b_o"],
                "ln1_g": row(lp["ln1_g"]), "ln1_b": row(lp["ln1_b"]),
                "w1": ff["w1"], "b1": ff["b1"], "w2": ff["w2"], "b2": ff["b2"],
                "ln2_g": row(lp["ln2_g"]), "ln2_b": row(lp["ln2_b"])}

    def prep_dec_layer(lp):
        sa, ca, ff = prep_self(lp["self_attn"]), prep_cross(lp["cross_attn"]), prep_ffn(lp["ff"])
        return {"sa_w_qkv": sa["w_qkv"], "sa_b_qkv": sa["b_qkv"],
                "sa_w_o": sa["w_o"], "sa_b_o": sa["b_o"],
                "ln1_g": row(lp["ln1_g"]), "ln1_b": row(lp["ln1_b"]),
                "ca_w_q": ca["w_q"], "ca_b_q": ca["b_q"],
                "ca_w_kv": ca["w_kv"], "ca_b_kv": ca["b_kv"],
                "ca_w_o": ca["w_o"], "ca_b_o": ca["b_o"],
                "ln2_g": row(lp["ln2_g"]), "ln2_b": row(lp["ln2_b"]),
                "w1": ff["w1"], "b1": ff["b1"], "w2": ff["w2"], "b2": ff["b2"],
                "ln3_g": row(lp["ln3_g"]), "ln3_b": row(lp["ln3_b"])}

    Np = _round_up(cfg["tgt_vocab"], 128)
    pad_n = Np - cfg["tgt_vocab"]
    out_w = jnp.pad(raw["out_w"], ((0, 0), (0, pad_n))).astype(MATMUL_DTYPE)
    out_b = jnp.pad(raw["out_b"], ((0, pad_n),)).reshape(1, Np).astype(jnp.float32)

    return {
        "encoder": {"embed": raw["encoder"]["embed"], "pe": raw["encoder"]["pe"],
                    "layers": [prep_enc_layer(lp) for lp in raw["encoder"]["layers"]]},
        "decoder": {"embed": raw["decoder"]["embed"], "pe": raw["decoder"]["pe"],
                    "layers": [prep_dec_layer(lp) for lp in raw["decoder"]["layers"]]},
        "out_w": out_w, "out_b": out_b,
    }


# ----------------------------------------------------------------------------
# Main
# ----------------------------------------------------------------------------

if __name__ == "__main__":
    cfg = dict(src_vocab=53, tgt_vocab=61, d_model=32, num_heads=4,
               num_layers=2, d_ff=64, max_len=64)
    B, S_src, S_tgt = 2, 8, 8

    root = jax.random.PRNGKey(0)
    k_param, k_src, k_tgt = jax.random.split(root, 3)

    raw_params = init_raw_params(k_param, cfg)
    params = prepare_params(raw_params, cfg)

    src = jax.random.randint(k_src, (B, S_src), 0, cfg["src_vocab"], dtype=jnp.int32)
    tgt = jax.random.randint(k_tgt, (B, S_tgt), 0, cfg["tgt_vocab"], dtype=jnp.int32)

    # src padding mask (all valid here) and causal target mask, PyTorch convention:
    # 1 = attend, 0 = masked.
    src_mask = jnp.ones((B, 1, 1, S_src), jnp.float32)
    tgt_mask = jnp.tril(jnp.ones((S_tgt, S_tgt), jnp.float32))[None, None, :, :]
    tgt_mask = jnp.broadcast_to(tgt_mask, (B, 1, S_tgt, S_tgt))

    fwd = functools.partial(transformer_forward, cfg=cfg)
    logits = fwd(params, src, tgt, src_mask, tgt_mask)
    logits = jax.block_until_ready(logits)

    assert logits.shape == (B, S_tgt, cfg["tgt_vocab"]), logits.shape
    assert jnp.all(jnp.isfinite(logits))
    print("KERNEL_OK")
</pallas_src>

<mosaic_0001>
module attributes {stable_mosaic.version = 11 : i64} {
  func.func @_encoder_layer_kernel(%arg0: i32, %arg1: memref<1x8x32xf32, #tpu.memory_space<vmem>>, %arg2: memref<1x8x8xf32, #tpu.memory_space<vmem>>, %arg3: memref<32x96xbf16, #tpu.memory_space<vmem>>, %arg4: memref<1x96xf32, #tpu.memory_space<vmem>>, %arg5: memref<32x32xbf16, #tpu.memory_space<vmem>>, %arg6: memref<1x32xf32, #tpu.memory_space<vmem>>, %arg7: memref<1x32xf32, #tpu.memory_space<vmem>>, %arg8: memref<1x32xf32, #tpu.memory_space<vmem>>, %arg9: memref<32x64xbf16, #tpu.memory_space<vmem>>, %arg10: memref<1x64xf32, #tpu.memory_space<vmem>>, %arg11: memref<64x32xbf16, #tpu.memory_space<vmem>>, %arg12: memref<1x32xf32, #tpu.memory_space<vmem>>, %arg13: memref<1x32xf32, #tpu.memory_space<vmem>>, %arg14: memref<1x32xf32, #tpu.memory_space<vmem>>, %arg15: memref<1x8x32xf32, #tpu.memory_space<vmem>>, %arg16: memref<8x32xf32, #tpu.memory_space<vmem>>) attributes {dimension_semantics = [#tpu.dimension_semantics<parallel>], iteration_bounds = array<i64: 2>, scalar_prefetch = 0 : i64, scratch_operands = 1 : i64, tpu.core_type = #tpu.core_type<tc>, window_params = [{transform_indices = @transform_0, window_bounds = array<i64: 1, 8, 32>}, {transform_indices = @transform_1, window_bounds = array<i64: 1, 8, 8>}, {pipeline_mode = #tpu.pipeline_mode<synchronous>, transform_indices = @transform_2, window_bounds = array<i64: 32, 96>}, {pipeline_mode = #tpu.pipeline_mode<synchronous>, transform_indices = @transform_3, window_bounds = array<i64: 1, 96>}, {pipeline_mode = #tpu.pipeline_mode<synchronous>, transform_indices = @transform_4, window_bounds = array<i64: 32, 32>}, {pipeline_mode = #tpu.pipeline_mode<synchronous>, transform_indices = @transform_5, window_bounds = array<i64: 1, 32>}, {pipeline_mode = #tpu.pipeline_mode<synchronous>, transform_indices = @transform_6, window_bounds = array<i64: 1, 32>}, {pipeline_mode = #tpu.pipeline_mode<synchronous>, transform_indices = @transform_7, window_bounds = array<i64: 1, 32>}, {pipeline_mode = #tpu.pipeline_mode<synchronous>, transform_indices = @transform_8, window_bounds = array<i64: 32, 64>}, {pipeline_mode = #tpu.pipeline_mode<synchronous>, transform_indices = @transform_9, window_bounds = array<i64: 1, 64>}, {pipeline_mode = #tpu.pipeline_mode<synchronous>, transform_indices = @transform_10, window_bounds = array<i64: 64, 32>}, {pipeline_mode = #tpu.pipeline_mode<synchronous>, transform_indices = @transform_11, window_bounds = array<i64: 1, 32>}, {pipeline_mode = #tpu.pipeline_mode<synchronous>, transform_indices = @transform_12, window_bounds = array<i64: 1, 32>}, {pipeline_mode = #tpu.pipeline_mode<synchronous>, transform_indices = @transform_13, window_bounds = array<i64: 1, 32>}, {transform_indices = @transform_14, window_bounds = array<i64: 1, 8, 32>}]} {
    %c0 = arith.constant 0 : index
    %c0_0 = arith.constant 0 : index
    %c0_1 = arith.constant 0 : index
    %0 = vector.load %arg1[%c0, %c0_0, %c0_1] : memref<1x8x32xf32, #tpu.memory_space<vmem>>, vector<1x8x32xf32>
    %1 = vector.shape_cast %0 : vector<1x8x32xf32> to vector<8x32xf32>
    %c0_2 = arith.constant 0 : index
    %c0_3 = arith.constant 0 : index
    %c0_4 = arith.constant 0 : index
    %2 = vector.load %arg2[%c0_2, %c0_3, %c0_4] : memref<1x8x8xf32, #tpu.memory_space<vmem>>, vector<1x8x8xf32>
    %3 = vector.shape_cast %2 : vector<1x8x8xf32> to vector<8x8xf32>
    %4 = arith.truncf %1 : vector<8x32xf32> to vector<8x32xbf16>
    %c0_5 = arith.constant 0 : index
    %c0_6 = arith.constant 0 : index
    %5 = vector.load %arg3[%c0_5, %c0_6] : memref<32x96xbf16, #tpu.memory_space<vmem>>, vector<32x96xbf16>
    %cst = arith.constant dense<0.000000e+00> : vector<8x96xf32>
    %6 = tpu.matmul %4, %5, %cst {dimension_numbers = #tpu.dot_dimension_numbers<[1], [0], [0], [1], [0, 0, 1, 1], [], []>} : vector<8x32xbf16>, vector<32x96xbf16>, vector<8x96xf32> -> vector<8x96xf32>
    %c0_7 = arith.constant 0 : index
    %c0_8 = arith.constant 0 : index
    %7 = vector.load %arg4[%c0_7, %c0_8] : memref<1x96xf32, #tpu.memory_space<vmem>>, vector<1x96xf32>
    %8 = vector.broadcast %7 : vector<1x96xf32> to vector<8x96xf32>
    %9 = arith.addf %6, %8 : vector<8x96xf32>
    %10 = arith.truncf %9 : vector<8x96xf32> to vector<8x96xbf16>
    %11 = vector.extract_strided_slice %10 {offsets = [0, 0], sizes = [8, 32], strides = [1, 1]} : vector<8x96xbf16> to vector<8x32xbf16>
    %12 = vector.extract_strided_slice %10 {offsets = [0, 32], sizes = [8, 32], strides = [1, 1]} : vector<8x96xbf16> to vector<8x32xbf16>
    %13 = vector.extract_strided_slice %10 {offsets = [0, 64], sizes = [8, 32], strides = [1, 1]} : vector<8x96xbf16> to vector<8x32xbf16>
    %14 = vector.extract_strided_slice %11 {offsets = [0, 0], sizes = [8, 8], strides = [1, 1]} : vector<8x32xbf16> to vector<8x8xbf16>
    %15 = vector.extract_strided_slice %12 {offsets = [0, 0], sizes = [8, 8], strides = [1, 1]} : vector<8x32xbf16> to vector<8x8xbf16>
    %cst_9 = arith.constant dense<0.000000e+00> : vector<8x8xf32>
    %16 = tpu.matmul %14, %15, %cst_9 {dimension_numbers = #tpu.dot_dimension_numbers<[1], [1], [0], [0], [0, 0, 1, 0], [], []>} : vector<8x8xbf16>, vector<8x8xbf16>, vector<8x8xf32> -> vector<8x8xf32>
    %17 = arith.addf %16, %3 : vector<8x8xf32>
    %cst_10 = arith.constant dense<0xFF800000> : vector<8xf32>
    %18 = vector.multi_reduction <maximumf>, %17, %cst_10 [1] : vector<8x8xf32> to vector<8xf32>
    %19 = vector.shape_cast %18 : vector<8xf32> to vector<8x1xf32>
    %20 = vector.broadcast %19 : vector<8x1xf32> to vector<8x8xf32>
    %21 = arith.subf %17, %20 : vector<8x8xf32>
    %22 = math.exp %21 : vector<8x8xf32>
    %cst_11 = arith.constant dense<0.000000e+00> : vector<8xf32>
    %23 = vector.multi_reduction <add>, %22, %cst_11 [1] : vector<8x8xf32> to vector<8xf32>
    %24 = vector.shape_cast %23 : vector<8xf32> to vector<8x1xf32>
    %25 = tpu.reciprocal %24 {approx = true} : vector<8x1xf32> -> vector<8x1xf32>
    %26 = vector.broadcast %25 : vector<8x1xf32> to vector<8x8xf32>
    %27 = arith.mulf %22, %26 : vector<8x8xf32>
    %28 = arith.truncf %27 : vector<8x8xf32> to vector<8x8xbf16>
    %29 = vector.extract_strided_slice %13 {offsets = [0, 0], sizes = [8, 8], strides = [1, 1]} : vector<8x32xbf16> to vector<8x8xbf16>
    %cst_12 = arith.constant dense<0.000000e+00> : vector<8x8xf32>
    %30 = tpu.matmul %28, %29, %cst_12 {dimension_numbers = #tpu.dot_dimension_numbers<[1], [0], [0], [1], [0, 0, 1, 1], [], []>} : vector<8x8xbf16>, vector<8x8xbf16>, vector<8x8xf32> -> vector<8x8xf32>
    %c0_13 = arith.constant 0 : index
    %c0_14 = arith.constant 0 : index
    %31 = vector.load %arg16[%c0_13, %c0_14] : memref<8x32xf32, #tpu.memory_space<vmem>>, vector<8x8xf32>
    tpu.vector_store %arg16[%c0_13, %c0_14], %30 {strides = array<i32>} : memref<8x32xf32, #tpu.memory_space<vmem>>, vector<8x8xf32>,
    %32 = vector.extract_strided_slice %11 {offsets = [0, 8], sizes = [8, 8], strides = [1, 1]} : vector<8x32xbf16> to vector<8x8xbf16>
    %33 = vector.extract_strided_slice %12 {offsets = [0, 8], sizes = [8, 8], strides = [1, 1]} : vector<8x32xbf16> to vector<8x8xbf16>
    %cst_15 = arith.constant dense<0.000000e+00> : vector<8x8xf32>
    %34 = tpu.matmul %32, %33, %cst_15 {dimension_numbers = #tpu.dot_dimension_numbers<[1], [1], [0], [0], [0, 0, 1, 0], [], []>} : vector<8x8xbf16>, vector<8x8xbf16>, vector<8x8xf32> -> vector<8x8xf32>
    %35 = arith.addf %34, %3 : vector<8x8xf32>
    %cst_16 = arith.constant dense<0xFF800000> : vector<8xf32>
    %36 = vector.multi_reduction <maximumf>, %35, %cst_16 [1] : vector<8x8xf32> to vector<8xf32>
    %37 = vector.shape_cast %36 : vector<8xf32> to vector<8x1xf32>
    %38 = vector.broadcast %37 : vector<8x1xf32> to vector<8x8xf32>
    %39 = arith.subf %35, %38 : vector<8x8xf32>
    %40 = math.exp %39 : vector<8x8xf32>
    %cst_17 = arith.constant dense<0.000000e+00> : vector<8xf32>
    %41 = vector.multi_reduction <add>, %40, %cst_17 [1] : vector<8x8xf32> to vector<8xf32>
    %42 = vector.shape_cast %41 : vector<8xf32> to vector<8x1xf32>
    %43 = tpu.reciprocal %42 {approx = true} : vector<8x1xf32> -> vector<8x1xf32>
    %44 = vector.broadcast %43 : vector<8x1xf32> to vector<8x8xf32>
    %45 = arith.mulf %40, %44 : vector<8x8xf32>
    %46 = arith.truncf %45 : vector<8x8xf32> to vector<8x8xbf16>
    %47 = vector.extract_strided_slice %13 {offsets = [0, 8], sizes = [8, 8], strides = [1, 1]} : vector<8x32xbf16> to vector<8x8xbf16>
    %cst_18 = arith.constant dense<0.000000e+00> : vector<8x8xf32>
    %48 = tpu.matmul %46, %47, %cst_18 {dimension_numbers = #tpu.dot_dimension_numbers<[1], [0], [0], [1], [0, 0, 1, 1], [], []>} : vector<8x8xbf16>, vector<8x8xbf16>, vector<8x8xf32> -> vector<8x8xf32>
    %c0_19 = arith.constant 0 : index
    %c8 = arith.constant 8 : index
    %49 = vector.load %arg16[%c0_19, %c8] : memref<8x32xf32, #tpu.memory_space<vmem>>, vector<8x8xf32>
    tpu.vector_store %arg16[%c0_19, %c8], %48 {strides = array<i32>} : memref<8x32xf32, #tpu.memory_space<vmem>>, vector<8x8xf32>,
    %50 = vector.extract_strided_slice %11 {offsets = [0, 16], sizes = [8, 8], strides = [1, 1]} : vector<8x32xbf16> to vector<8x8xbf16>
    %51 = vector.extract_strided_slice %12 {offsets = [0, 16], sizes = [8, 8], strides = [1, 1]} : vector<8x32xbf16> to vector<8x8xbf16>
    %cst_20 = arith.constant dense<0.000000e+00> : vector<8x8xf32>
    %52 = tpu.matmul %50, %51, %cst_20 {dimension_numbers = #tpu.dot_dimension_numbers<[1], [1], [0], [0], [0, 0, 1, 0], [], []>} : vector<8x8xbf16>, vector<8x8xbf16>, vector<8x8xf32> -> vector<8x8xf32>
    %53 = arith.addf %52, %3 : vector<8x8xf32>
    %cst_21 = arith.constant dense<0xFF800000> : vector<8xf32>
    %54 = vector.multi_reduction <maximumf>, %53, %cst_21 [1] : vector<8x8xf32> to vector<8xf32>
    %55 = vector.shape_cast %54 : vector<8xf32> to vector<8x1xf32>
    %56 = vector.broadcast %55 : vector<8x1xf32> to vector<8x8xf32>
    %57 = arith.subf %53, %56 : vector<8x8xf32>
    %58 = math.exp %57 : vector<8x8xf32>
    %cst_22 = arith.constant dense<0.000000e+00> : vector<8xf32>
    %59 = vector.multi_reduction <add>, %58, %cst_22 [1] : vector<8x8xf32> to vector<8xf32>
    %60 = vector.shape_cast %59 : vector<8xf32> to vector<8x1xf32>
    %61 = tpu.reciprocal %60 {approx = true} : vector<8x1xf32> -> vector<8x1xf32>
    %62 = vector.broadcast %61 : vector<8x1xf32> to vector<8x8xf32>
    %63 = arith.mulf %58, %62 : vector<8x8xf32>
    %64 = arith.truncf %63 : vector<8x8xf32> to vector<8x8xbf16>
    %65 = vector.extract_strided_slice %13 {offsets = [0, 16], sizes = [8, 8], strides = [1, 1]} : vector<8x32xbf16> to vector<8x8xbf16>
    %cst_23 = arith.constant dense<0.000000e+00> : vector<8x8xf32>
    %66 = tpu.matmul %64, %65, %cst_23 {dimension_numbers = #tpu.dot_dimension_numbers<[1], [0], [0], [1], [0, 0, 1, 1], [], []>} : vector<8x8xbf16>, vector<8x8xbf16>, vector<8x8xf32> -> vector<8x8xf32>
    %c0_24 = arith.constant 0 : index
    %c16 = arith.constant 16 : index
    %67 = vector.load %arg16[%c0_24, %c16] : memref<8x32xf32, #tpu.memory_space<vmem>>, vector<8x8xf32>
    tpu.vector_store %arg16[%c0_24, %c16], %66 {strides = array<i32>} : memref<8x32xf32, #tpu.memory_space<vmem>>, vector<8x8xf32>,
    %68 = vector.extract_strided_slice %11 {offsets = [0, 24], sizes = [8, 8], strides = [1, 1]} : vector<8x32xbf16> to vector<8x8xbf16>
    %69 = vector.extract_strided_slice %12 {offsets = [0, 24], sizes = [8, 8], strides = [1, 1]} : vector<8x32xbf16> to vector<8x8xbf16>
    %cst_25 = arith.constant dense<0.000000e+00> : vector<8x8xf32>
    %70 = tpu.matmul %68, %69, %cst_25 {dimension_numbers = #tpu.dot_dimension_numbers<[1], [1], [0], [0], [0, 0, 1, 0], [], []>} : vector<8x8xbf16>, vector<8x8xbf16>, vector<8x8xf32> -> vector<8x8xf32>
    %71 = arith.addf %70, %3 : vector<8x8xf32>
    %cst_26 = arith.constant dense<0xFF800000> : vector<8xf32>
    %72 = vector.multi_reduction <maximumf>, %71, %cst_26 [1] : vector<8x8xf32> to vector<8xf32>
    %73 = vector.shape_cast %72 : vector<8xf32> to vector<8x1xf32>
    %74 = vector.broadcast %73 : vector<8x1xf32> to vector<8x8xf32>
    %75 = arith.subf %71, %74 : vector<8x8xf32>
    %76 = math.exp %75 : vector<8x8xf32>
    %cst_27 = arith.constant dense<0.000000e+00> : vector<8xf32>
    %77 = vector.multi_reduction <add>, %76, %cst_27 [1] : vector<8x8xf32> to vector<8xf32>
    %78 = vector.shape_cast %77 : vector<8xf32> to vector<8x1xf32>
    %79 = tpu.reciprocal %78 {approx = true} : vector<8x1xf32> -> vector<8x1xf32>
    %80 = vector.broadcast %79 : vector<8x1xf32> to vector<8x8xf32>
    %81 = arith.mulf %76, %80 : vector<8x8xf32>
    %82 = arith.truncf %81 : vector<8x8xf32> to vector<8x8xbf16>
    %83 = vector.extract_strided_slice %13 {offsets = [0, 24], sizes = [8, 8], strides = [1, 1]} : vector<8x32xbf16> to vector<8x8xbf16>
    %cst_28 = arith.constant dense<0.000000e+00> : vector<8x8xf32>
    %84 = tpu.matmul %82, %83, %cst_28 {dimension_numbers = #tpu.dot_dimension_numbers<[1], [0], [0], [1], [0, 0, 1, 1], [], []>} : vector<8x8xbf16>, vector<8x8xbf16>, vector<8x8xf32> -> vector<8x8xf32>
    %c0_29 = arith.constant 0 : index
    %c24 = arith.constant 24 : index
    %85 = vector.load %arg16[%c0_29, %c24] : memref<8x32xf32, #tpu.memory_space<vmem>>, vector<8x8xf32>
    tpu.vector_store %arg16[%c0_29, %c24], %84 {strides = array<i32>} : memref<8x32xf32, #tpu.memory_space<vmem>>, vector<8x8xf32>,
    %c0_30 = arith.constant 0 : index
    %c0_31 = arith.constant 0 : index
    %86 = vector.load %arg16[%c0_30, %c0_31] : memref<8x32xf32, #tpu.memory_space<vmem>>, vector<8x32xf32>
    %87 = arith.truncf %86 : vector<8x32xf32> to vector<8x32xbf16>
    %c0_32 = arith.constant 0 : index
    %c0_33 = arith.constant 0 : index
    %88 = vector.load %arg5[%c0_32, %c0_33] : memref<32x32xbf16, #tpu.memory_space<vmem>>, vector<32x32xbf16>
    %cst_34 = arith.constant dense<0.000000e+00> : vector<8x32xf32>
    %89 = tpu.matmul %87, %88, %cst_34 {dimension_numbers = #tpu.dot_dimension_numbers<[1], [0], [0], [1], [0, 0, 1, 1], [], []>} : vector<8x32xbf16>, vector<32x32xbf16>, vector<8x32xf32> -> vector<8x32xf32>
    %c0_35 = arith.constant 0 : index
    %c0_36 = arith.constant 0 : index
    %90 = vector.load %arg6[%c0_35, %c0_36] : memref<1x32xf32, #tpu.memory_space<vmem>>, vector<1x32xf32>
    %91 = vector.broadcast %90 : vector<1x32xf32> to vector<8x32xf32>
    %92 = arith.addf %89, %91 : vector<8x32xf32>
    %93 = arith.addf %1, %92 : vector<8x32xf32>
    %c0_37 = arith.constant 0 : index
    %c0_38 = arith.constant 0 : index
    %94 = vector.load %arg7[%c0_37, %c0_38] : memref<1x32xf32, #tpu.memory_space<vmem>>, vector<1x32xf32>
    %c0_39 = arith.constant 0 : index
    %c0_40 = arith.constant 0 : index
    %95 = vector.load %arg8[%c0_39, %c0_40] : memref<1x32xf32, #tpu.memory_space<vmem>>, vector<1x32xf32>
    %cst_41 = arith.constant dense<0.000000e+00> : vector<8xf32>
    %96 = vector.multi_reduction <add>, %93, %cst_41 [1] : vector<8x32xf32> to vector<8xf32>
    %97 = vector.shape_cast %96 : vector<8xf32> to vector<8x1xf32>
    %cst_42 = arith.constant 3.200000e+01 : f32
    %98 = vector.broadcast %cst_42 : f32 to vector<8x1xf32>
    %99 = arith.divf %97, %98 : vector<8x1xf32>
    %100 = vector.broadcast %99 : vector<8x1xf32> to vector<8x32xf32>
    %101 = arith.subf %93, %100 : vector<8x32xf32>
    %102 = arith.mulf %101, %101 : vector<8x32xf32>
    %cst_43 = arith.constant dense<0.000000e+00> : vector<8xf32>
    %103 = vector.multi_reduction <add>, %102, %cst_43 [1] : vector<8x32xf32> to vector<8xf32>
    %104 = vector.shape_cast %103 : vector<8xf32> to vector<8x1xf32>
    %cst_44 = arith.constant 3.200000e+01 : f32
    %105 = vector.broadcast %cst_44 : f32 to vector<8x1xf32>
    %106 = arith.divf %104, %105 : vector<8x1xf32>
    %107 = vector.broadcast %99 : vector<8x1xf32> to vector<8x32xf32>
    %108 = arith.subf %93, %107 : vector<8x32xf32>
    %cst_45 = arith.constant 9.99999974E-6 : f32
    %109 = vector.broadcast %cst_45 : f32 to vector<8x1xf32>
    %110 = arith.addf %106, %109 : vector<8x1xf32>
    %111 = math.rsqrt %110 : vector<8x1xf32>
    %112 = vector.broadcast %111 : vector<8x1xf32> to vector<8x32xf32>
    %113 = arith.mulf %108, %112 : vector<8x32xf32>
    %114 = vector.broadcast %94 : vector<1x32xf32> to vector<8x32xf32>
    %115 = arith.mulf %113, %114 : vector<8x32xf32>
    %116 = vector.broadcast %95 : vector<1x32xf32> to vector<8x32xf32>
    %117 = arith.addf %115, %116 : vector<8x32xf32>
    %118 = arith.truncf %117 : vector<8x32xf32> to vector<8x32xbf16>
    %c0_46 = arith.constant 0 : index
    %c0_47 = arith.constant 0 : index
    %119 = vector.load %arg9[%c0_46, %c0_47] : memref<32x64xbf16, #tpu.memory_space<vmem>>, vector<32x64xbf16>
    %cst_48 = arith.constant dense<0.000000e+00> : vector<8x64xf32>
    %120 = tpu.matmul %118, %119, %cst_48 {dimension_numbers = #tpu.dot_dimension_numbers<[1], [0], [0], [1], [0, 0, 1, 1], [], []>} : vector<8x32xbf16>, vector<32x64xbf16>, vector<8x64xf32> -> vector<8x64xf32>
    %c0_49 = arith.constant 0 : index
    %c0_50 = arith.constant 0 : index
    %121 = vector.load %arg10[%c0_49, %c0_50] : memref<1x64xf32, #tpu.memory_space<vmem>>, vector<1x64xf32>
    %122 = vector.broadcast %121 : vector<1x64xf32> to vector<8x64xf32>
    %123 = arith.addf %120, %122 : vector<8x64xf32>
    %cst_51 = arith.constant 0.000000e+00 : f32
    %124 = vector.broadcast %cst_51 : f32 to vector<8x64xf32>
    %125 = arith.maximumf %123, %124 : vector<8x64xf32>
    %126 = arith.truncf %125 : vector<8x64xf32> to vector<8x64xbf16>
    %c0_52 = arith.constant 0 : index
    %c0_53 = arith.constant 0 : index
    %127 = vector.load %arg11[%c0_52, %c0_53] : memref<64x32xbf16, #tpu.memory_space<vmem>>, vector<64x32xbf16>
    %cst_54 = arith.constant dense<0.000000e+00> : vector<8x32xf32>
    %128 = tpu.matmul %126, %127, %cst_54 {dimension_numbers = #tpu.dot_dimension_numbers<[1], [0], [0], [1], [0, 0, 1, 1], [], []>} : vector<8x64xbf16>, vector<64x32xbf16>, vector<8x32xf32> -> vector<8x32xf32>
    %c0_55 = arith.constant 0 : index
    %c0_56 = arith.constant 0 : index
    %129 = vector.load %arg12[%c0_55, %c0_56] : memref<1x32xf32, #tpu.memory_space<vmem>>, vector<1x32xf32>
    %130 = vector.broadcast %129 : vector<1x32xf32> to vector<8x32xf32>
    %131 = arith.addf %128, %130 : vector<8x32xf32>
    %132 = arith.addf %117, %131 : vector<8x32xf32>
    %c0_57 = arith.constant 0 : index
    %c0_58 = arith.constant 0 : index
    %133 = vector.load %arg13[%c0_57, %c0_58] : memref<1x32xf32, #tpu.memory_space<vmem>>, vector<1x32xf32>
    %c0_59 = arith.constant 0 : index
    %c0_60 = arith.constant 0 : index
    %134 = vector.load %arg14[%c0_59, %c0_60] : memref<1x32xf32, #tpu.memory_space<vmem>>, vector<1x32xf32>
    %cst_61 = arith.constant dense<0.000000e+00> : vector<8xf32>
    %135 = vector.multi_reduction <add>, %132, %cst_61 [1] : vector<8x32xf32> to vector<8xf32>
    %136 = vector.shape_cast %135 : vector<8xf32> to vector<8x1xf32>
    %cst_62 = arith.constant 3.200000e+01 : f32
    %137 = vector.broadcast %cst_62 : f32 to vector<8x1xf32>
    %138 = arith.divf %136, %137 : vector<8x1xf32>
    %139 = vector.broadcast %138 : vector<8x1xf32> to vector<8x32xf32>
    %140 = arith.subf %132, %139 : vector<8x32xf32>
    %141 = arith.mulf %140, %140 : vector<8x32xf32>
    %cst_63 = arith.constant dense<0.000000e+00> : vector<8xf32>
    %142 = vector.multi_reduction <add>, %141, %cst_63 [1] : vector<8x32xf32> to vector<8xf32>
    %143 = vector.shape_cast %142 : vector<8xf32> to vector<8x1xf32>
    %cst_64 = arith.constant 3.200000e+01 : f32
    %144 = vector.broadcast %cst_64 : f32 to vector<8x1xf32>
    %145 = arith.divf %143, %144 : vector<8x1xf32>
    %146 = vector.broadcast %138 : vector<8x1xf32> to vector<8x32xf32>
    %147 = arith.subf %132, %146 : vector<8x32xf32>
    %cst_65 = arith.constant 9.99999974E-6 : f32
    %148 = vector.broadcast %cst_65 : f32 to vector<8x1xf32>
    %149 = arith.addf %145, %148 : vector<8x1xf32>
    %150 = math.rsqrt %149 : vector<8x1xf32>
    %151 = vector.broadcast %150 : vector<8x1xf32> to vector<8x32xf32>
    %152 = arith.mulf %147, %151 : vector<8x32xf32>
    %153 = vector.broadcast %133 : vector<1x32xf32> to vector<8x32xf32>
    %154 = arith.mulf %152, %153 : vector<8x32xf32>
    %155 = vector.broadcast %134 : vector<1x32xf32> to vector<8x32xf32>
    %156 = arith.addf %154, %155 : vector<8x32xf32>
    %c0_66 = arith.constant 0 : index
    %c0_67 = arith.constant 0 : index
    %c0_68 = arith.constant 0 : index
    %157 = vector.load %arg15[%c0_66, %c0_67, %c0_68] : memref<1x8x32xf32, #tpu.memory_space<vmem>>, vector<1x8x32xf32>
    %158 = vector.shape_cast %157 : vector<1x8x32xf32> to vector<8x32xf32>
    %159 = vector.shape_cast %156 : vector<8x32xf32> to vector<1x8x32xf32>
    tpu.vector_store %arg15[%c0_66, %c0_67, %c0_68], %159 {strides = array<i32>} : memref<1x8x32xf32, #tpu.memory_space<vmem>>, vector<1x8x32xf32>,
    return
  }
  func.func @transform_0(%arg0: i32) -> (i32, i32, i32) {
    %c0_i32 = arith.constant 0 : i32
    %c0_i32_0 = arith.constant 0 : i32
    %c0_i32_1 = arith.constant 0 : i32
    return %arg0, %c0_i32, %c0_i32_0 : i32, i32, i32
  }
  func.func @transform_1(%arg0: i32) -> (i32, i32, i32) {
    %c0_i32 = arith.constant 0 : i32
    %c0_i32_0 = arith.constant 0 : i32
    %c0_i32_1 = arith.constant 0 : i32
    return %arg0, %c0_i32, %c0_i32_0 : i32, i32, i32
  }
  func.func @transform_2(%arg0: i32) -> (i32, i32) {
    %c0_i32 = arith.constant 0 : i32
    %c0_i32_0 = arith.constant 0 : i32
    %c0_i32_1 = arith.constant 0 : i32
    return %c0_i32, %c0_i32_0 : i32, i32
  }
  func.func @transform_3(%arg0: i32) -> (i32, i32) {
    %c0_i32 = arith.constant 0 : i32
    %c0_i32_0 = arith.constant 0 : i32
    %c0_i32_1 = arith.constant 0 : i32
    return %c0_i32, %c0_i32_0 : i32, i32
  }
  func.func @transform_4(%arg0: i32) -> (i32, i32) {
    %c0_i32 = arith.constant 0 : i32
    %c0_i32_0 = arith.constant 0 : i32
    %c0_i32_1 = arith.constant 0 : i32
    return %c0_i32, %c0_i32_0 : i32, i32
  }
  func.func @transform_5(%arg0: i32) -> (i32, i32) {
    %c0_i32 = arith.constant 0 : i32
    %c0_i32_0 = arith.constant 0 : i32
    %c0_i32_1 = arith.constant 0 : i32
    return %c0_i32, %c0_i32_0 : i32, i32
  }
  func.func @transform_6(%arg0: i32) -> (i32, i32) {
    %c0_i32 = arith.constant 0 : i32
    %c0_i32_0 = arith.constant 0 : i32
    %c0_i32_1 = arith.constant 0 : i32
    return %c0_i32, %c0_i32_0 : i32, i32
  }
  func.func @transform_7(%arg0: i32) -> (i32, i32) {
    %c0_i32 = arith.constant 0 : i32
    %c0_i32_0 = arith.constant 0 : i32
    %c0_i32_1 = arith.constant 0 : i32
    return %c0_i32, %c0_i32_0 : i32, i32
  }
  func.func @transform_8(%arg0: i32) -> (i32, i32) {
    %c0_i32 = arith.constant 0 : i32
    %c0_i32_0 = arith.constant 0 : i32
    %c0_i32_1 = arith.constant 0 : i32
    return %c0_i32, %c0_i32_0 : i32, i32
  }
  func.func @transform_9(%arg0: i32) -> (i32, i32) {
    %c0_i32 = arith.constant 0 : i32
    %c0_i32_0 = arith.constant 0 : i32
    %c0_i32_1 = arith.constant 0 : i32
    return %c0_i32, %c0_i32_0 : i32, i32
  }
  func.func @transform_10(%arg0: i32) -> (i32, i32) {
    %c0_i32 = arith.constant 0 : i32
    %c0_i32_0 = arith.constant 0 : i32
    %c0_i32_1 = arith.constant 0 : i32
    return %c0_i32, %c0_i32_0 : i32, i32
  }
  func.func @transform_11(%arg0: i32) -> (i32, i32) {
    %c0_i32 = arith.constant 0 : i32
    %c0_i32_0 = arith.constant 0 : i32
    %c0_i32_1 = arith.constant 0 : i32
    return %c0_i32, %c0_i32_0 : i32, i32
  }
  func.func @transform_12(%arg0: i32) -> (i32, i32) {
    %c0_i32 = arith.constant 0 : i32
    %c0_i32_0 = arith.constant 0 : i32
    %c0_i32_1 = arith.constant 0 : i32
    return %c0_i32, %c0_i32_0 : i32, i32
  }
  func.func @transform_13(%arg0: i32) -> (i32, i32) {
    %c0_i32 = arith.constant 0 : i32
    %c0_i32_0 = arith.constant 0 : i32
    %c0_i32_1 = arith.constant 0 : i32
    return %c0_i32, %c0_i32_0 : i32, i32
  }
  func.func @transform_14(%arg0: i32) -> (i32, i32, i32) {
    %c0_i32 = arith.constant 0 : i32
    %c0_i32_0 = arith.constant 0 : i32
    %c0_i32_1 = arith.constant 0 : i32
    return %arg0, %c0_i32, %c0_i32_0 : i32, i32, i32
  }
}

</mosaic_0001>

<llo_original>
// kernel: tpu_custom_call.1
$region0: #{tpu_custom_call.1}
  #allocation0 [shape = 'u32[]', space=smem, size = 0x4, offset = 0x4, fixed_abs, tag = 'smem constant byte address 0x4 - core index']
  #allocation1 [shape = 'u32[72,128]{1,0:T(1,128)}', space=vmem, size = 0x9000, scoped, tag = 'internal scratch']
  #allocation2 [shape = 'f32[8,32]{1,0:T(8,128)}', space=vmem, size = 0x1000, scoped, tag = 'scratch operand']
  %s0 = inlined_call_operand.vmem [shape: f32[2,8,32], index: 0, kind: input, shape index: {}]
  %s1 = inlined_call_operand.vmem [shape: f32[2,8,8], index: 1, kind: input, shape index: {}]
  %s2 = inlined_call_operand.vmem [shape: bf16[32,96], index: 2, kind: input, shape index: {}]
  %s3 = inlined_call_operand.vmem [shape: f32[1,96], index: 3, kind: input, shape index: {}]
  %s4 = inlined_call_operand.hbm [shape: bf16[32,32], index: 4, kind: input, shape index: {}]
  %s5 = inlined_call_operand.vmem [shape: f32[1,32], index: 5, kind: input, shape index: {}]
  %s6 = inlined_call_operand.vmem [shape: f32[1,32], index: 6, kind: input, shape index: {}]
  %s7 = inlined_call_operand.vmem [shape: f32[1,32], index: 7, kind: input, shape index: {}]
  %s8 = inlined_call_operand.hbm [shape: bf16[32,64], index: 8, kind: input, shape index: {}]
  %s9 = inlined_call_operand.vmem [shape: f32[1,64], index: 9, kind: input, shape index: {}]
  %s10 = inlined_call_operand.vmem [shape: bf16[64,32], index: 10, kind: input, shape index: {}]
  %s11 = inlined_call_operand.vmem [shape: f32[1,32], index: 11, kind: input, shape index: {}]
  %s12 = inlined_call_operand.vmem [shape: f32[1,32], index: 12, kind: input, shape index: {}]
  %s13 = inlined_call_operand.vmem [shape: f32[1,32], index: 13, kind: input, shape index: {}]
  %s14 = inlined_call_operand.hbm [shape: f32[2,8,32], index: 14, kind: output, shape index: {}]
  %s15 = sld [smem:[#allocation0]]
  $region97: #{tpu_custom_call.1} parent=0
    _
  %s17 = ssub.s32 1, %s15
  %s18 = scalar_select 0, %s17, %s15
  $region1: #{tpu_custom_call.1} parent=0
    #allocation3 [shape = 'u8[8192]{0}', space=vmem, size = 0x2000, scoped, tag = 'input window, operand 4, single buffered']
    #allocation4 [shape = 's32[2]{0}', space=sflag, size = 0x8, scoped, tag = 'scoped memory for tpu_custom_call.1']
    #allocation5 [shape = 's32[2]{0}', space=sflag, size = 0x8, scoped, tag = 'scoped memory for tpu_custom_call.1']
    #allocation6 [shape = 'u8[8192]{0}', space=vmem, size = 0x2000, scoped, tag = 'input window, operand 8, single buffered']
    #allocation7 [shape = 's32[1]{0}', space=sflag, size = 0x4, scoped, tag = 'scoped memory for tpu_custom_call.1']
    #allocation8 [shape = 'u8[8192]{0}', space=vmem, size = 0x2000, scoped, tag = 'output window, operand 0']
    %19 = vsyncpa [#allocation4], 0
    %20 = vsyncpa [#allocation7], 0
    %21 = vsyncpa [#allocation5], 0
    %s22 = scalar_lea.sflag [#allocation5], 1
    %23 = vsyncpa %s22, 0
    loop: start=0, step=1, limit=4
    $region2: #{tpu_custom_call.1} parent=1 // loop_pre_header
      _
    $region3: #{tpu_custom_call.1} parent=1 // loop_header
      %s25 = sphi 0, %s29
      %p26 = scmp.ge.s32.totalorder %s25, 4
      %s35 = sphi 0, %s37
      %s38 = sphi 0, %s35
      %s39 = sphi 0, %s38
      %s55 = sphi 0, %s39
      %s61 = sphi 0, %s63
      %s64 = sphi 0, %s61
      %s65 = sphi 0, %s64
      %s81 = sphi 0, %s65
      %s85 = sphi 0, %s85
      %s87 = sphi 0, %s85
      %s88 = sphi 0, %s87
      %s102 = sphi 0, %s88
      %s106 = sphi 0, %s106
      %s108 = sphi 0, %s106
      %s109 = sphi 0, %s108
      %s123 = sphi 0, %s109
      %s127 = sphi 0, %s127
      %s129 = sphi 0, %s127
      %s130 = sphi 0, %s129
      %s144 = sphi 0, %s130
      %s148 = sphi 0, %s148
      %s150 = sphi 0, %s148
      %s151 = sphi 0, %s150
      %s165 = sphi 0, %s151
      %s169 = sphi 0, %s169
      %s171 = sphi 0, %s169
      %s172 = sphi 0, %s171
      %s186 = sphi 0, %s172
      %s190 = sphi 0, %s190
      %s192 = sphi 0, %s190
      %s193 = sphi 0, %s192
      %s207 = sphi 0, %s193
      %s211 = sphi 0, %s211
      %s213 = sphi 0, %s211
      %s214 = sphi 0, %s213
      %s228 = sphi 0, %s214
      %s232 = sphi 0, %s232
      %s234 = sphi 0, %s232
      %s235 = sphi 0, %s234
      %s249 = sphi 0, %s235
      %s253 = sphi 0, %s253
      %s255 = sphi 0, %s253
      %s256 = sphi 0, %s255
      %s270 = sphi 0, %s256
      %s274 = sphi 0, %s274
      %s276 = sphi 0, %s274
      %s277 = sphi 0, %s276
      %s291 = sphi 0, %s277
      %s295 = sphi 0, %s295
      %s297 = sphi 0, %s295
      %s298 = sphi 0, %s297
      %s312 = sphi 0, %s298
      %s316 = sphi 0, %s316
      %s318 = sphi 0, %s316
      %s319 = sphi 0, %s318
      %s333 = sphi 0, %s319
      %s339 = sphi 0, %s341
      %s342 = sphi 0, %s339
      %s343 = sphi 0, %s342
      %s359 = sphi 0, %s343
    $region4: #{tpu_custom_call.1} parent=1 // loop_header_branch
      %28 = sbr.rel (%p26) target = $region8
    $region5: #{tpu_custom_call.1} parent=1 // loop_body
      %s30 = ssub.s32 %s25, 1
      %s31 = ssub.s32 %s25, 2
      %s32 = sadd.s32 %s25, 1
      %s33 = ssub.s32 %s25, %s32
      %p34 = scmp.eq.s32.totalorder %s33, 0
      %s36 = sadd.s32 %s35, 1
      %s37 = scalar_select %p34, %s35, %s36
      %p40 = pneg %p34
      %p41 = scmp.eq.s32.totalorder %s25, 1
      %p42 = por %p40, %p41
      %p43 = scmp.ne.s32.totalorder %s35, %s38
      %p44 = scmp.eq.s32.totalorder %s25, 0
      %p45 = por %p43, %p44
      %p46 = scmp.ne.s32.totalorder %s35, %s38
      %p47 = scmp.eq.s32.totalorder %s30, 1
      %p48 = por %p46, %p47
      %p49 = scmp.ne.s32.totalorder %s38, %s39
      %p50 = scmp.eq.s32.totalorder %s30, 0
      %p51 = por %p49, %p50
      %p52 = scmp.ne.s32.totalorder %s38, %s39
      %p53 = scmp.eq.s32.totalorder %s31, 1
      %p54 = por %p52, %p53
      %p56 = scmp.ne.s32.totalorder %s39, %s55
      %p57 = scmp.eq.s32.totalorder %s31, 0
      %p58 = por %p56, %p57
      %s59 = ssub.s32 %s25, %s32
      %p60 = scmp.eq.s32.totalorder %s59, 0
      %s62 = sadd.s32 %s61, 1
      %s63 = scalar_select %p60, %s61, %s62
      %p66 = pneg %p60
      %p67 = scmp.eq.s32.totalorder %s25, 1
      %p68 = por %p66, %p67
      %p69 = scmp.ne.s32.totalorder %s61, %s64
      %p70 = scmp.eq.s32.totalorder %s25, 0
      %p71 = por %p69, %p70
      %p72 = scmp.ne.s32.totalorder %s61, %s64
      %p73 = scmp.eq.s32.totalorder %s30, 1
      %p74 = por %p72, %p73
      %p75 = scmp.ne.s32.totalorder %s64, %s65
      %p76 = scmp.eq.s32.totalorder %s30, 0
      %p77 = por %p75, %p76
      %p78 = scmp.ne.s32.totalorder %s64, %s65
      %p79 = scmp.eq.s32.totalorder %s31, 1
      %p80 = por %p78, %p79
      %p82 = scmp.ne.s32.totalorder %s65, %s81
      %p83 = scmp.eq.s32.totalorder %s31, 0
      %p84 = por %p82, %p83
      %s86 = sadd.s32 %s85, 1
      %p89 = scmp.eq.s32.totalorder %s25, 1
      %p90 = scmp.ne.s32.totalorder %s85, %s87
      %p91 = scmp.eq.s32.totalorder %s25, 0
      %p92 = por %p90, %p91
      %p93 = scmp.ne.s32.totalorder %s85, %s87
      %p94 = scmp.eq.s32.totalorder %s30, 1
      %p95 = por %p93, %p94
      %p96 = scmp.ne.s32.totalorder %s87, %s88
      %p97 = scmp.eq.s32.totalorder %s30, 0
      %p98 = por %p96, %p97
      %p99 = scmp.ne.s32.totalorder %s87, %s88
      %p100 = scmp.eq.s32.totalorder %s31, 1
      %p101 = por %p99, %p100
      %p103 = scmp.ne.s32.totalorder %s88, %s102
      %p104 = scmp.eq.s32.totalorder %s31, 0
      %p105 = por %p103, %p104
      %s107 = sadd.s32 %s106, 1
      %p110 = scmp.eq.s32.totalorder %s25, 1
      %p111 = scmp.ne.s32.totalorder %s106, %s108
      %p112 = scmp.eq.s32.totalorder %s25, 0
      %p113 = por %p111, %p112
      %p114 = scmp.ne.s32.totalorder %s106, %s108
      %p115 = scmp.eq.s32.totalorder %s30, 1
      %p116 = por %p114, %p115
      %p117 = scmp.ne.s32.totalorder %s108, %s109
      %p118 = scmp.eq.s32.totalorder %s30, 0
      %p119 = por %p117, %p118
      %p120 = scmp.ne.s32.totalorder %s108, %s109
      %p121 = scmp.eq.s32.totalorder %s31, 1
      %p122 = por %p120, %p121
      %p124 = scmp.ne.s32.totalorder %s109, %s123
      %p125 = scmp.eq.s32.totalorder %s31, 0
      %p126 = por %p124, %p125
      %s128 = sadd.s32 %s127, 1
      %p131 = scmp.eq.s32.totalorder %s25, 1
      %p132 = scmp.ne.s32.totalorder %s127, %s129
      %p133 = scmp.eq.s32.totalorder %s25, 0
      %p134 = por %p132, %p133
      %p135 = scmp.ne.s32.totalorder %s127, %s129
      %p136 = scmp.eq.s32.totalorder %s30, 1
      %p137 = por %p135, %p136
      %p138 = scmp.ne.s32.totalorder %s129, %s130
      %p139 = scmp.eq.s32.totalorder %s30, 0
      %p140 = por %p138, %p139
      %p141 = scmp.ne.s32.totalorder %s129, %s130
      %p142 = scmp.eq.s32.totalorder %s31, 1
      %p143 = por %p141, %p142
      %p145 = scmp.ne.s32.totalorder %s130, %s144
      %p146 = scmp.eq.s32.totalorder %s31, 0
      %p147 = por %p145, %p146
      %s149 = sadd.s32 %s148, 1
      %p152 = scmp.eq.s32.totalorder %s25, 1
      %p153 = scmp.ne.s32.totalorder %s148, %s150
      %p154 = scmp.eq.s32.totalorder %s25, 0
      %p155 = por %p153, %p154
      %p156 = scmp.ne.s32.totalorder %s148, %s150
      %p157 = scmp.eq.s32.totalorder %s30, 1
      %p158 = por %p156, %p157
      %p159 = scmp.ne.s32.totalorder %s150, %s151
      %p160 = scmp.eq.s32.totalorder %s30, 0
      %p161 = por %p159, %p160
      %p162 = scmp.ne.s32.totalorder %s150, %s151
      %p163 = scmp.eq.s32.totalorder %s31, 1
      %p164 = por %p162, %p163
      %p166 = scmp.ne.s32.totalorder %s151, %s165
      %p167 = scmp.eq.s32.totalorder %s31, 0
      %p168 = por %p166, %p167
      %s170 = sadd.s32 %s169, 1
      %p173 = scmp.eq.s32.totalorder %s25, 1
      %p174 = scmp.ne.s32.totalorder %s169, %s171
      %p175 = scmp.eq.s32.totalorder %s25, 0
      %p176 = por %p174, %p175
      %p177 = scmp.ne.s32.totalorder %s169, %s171
      %p178 = scmp.eq.s32.totalorder %s30, 1
      %p179 = por %p177, %p178
      %p180 = scmp.ne.s32.totalorder %s171, %s172
      %p181 = scmp.eq.s32.totalorder %s30, 0
      %p182 = por %p180, %p181
      %p183 = scmp.ne.s32.totalorder %s171, %s172
      %p184 = scmp.eq.s32.totalorder %s31, 1
      %p185 = por %p183, %p184
      %p187 = scmp.ne.s32.totalorder %s172, %s186
      %p188 = scmp.eq.s32.totalorder %s31, 0
      %p189 = por %p187, %p188
      %s191 = sadd.s32 %s190, 1
      %p194 = scmp.eq.s32.totalorder %s25, 1
      %p195 = scmp.ne.s32.totalorder %s190, %s192
      %p196 = scmp.eq.s32.totalorder %s25, 0
      %p197 = por %p195, %p196
      %p198 = scmp.ne.s32.totalorder %s190, %s192
      %p199 = scmp.eq.s32.totalorder %s30, 1
      %p200 = por %p198, %p199
      %p201 = scmp.ne.s32.totalorder %s192, %s193
      %p202 = scmp.eq.s32.totalorder %s30, 0
      %p203 = por %p201, %p202
      %p204 = scmp.ne.s32.totalorder %s192, %s193
      %p205 = scmp.eq.s32.totalorder %s31, 1
      %p206 = por %p204, %p205
      %p208 = scmp.ne.s32.totalorder %s193, %s207
      %p209 = scmp.eq.s32.totalorder %s31, 0
      %p210 = por %p208, %p209
      %s212 = sadd.s32 %s211, 1
      %p215 = scmp.eq.s32.totalorder %s25, 1
      %p216 = scmp.ne.s32.totalorder %s211, %s213
      %p217 = scmp.eq.s32.totalorder %s25, 0
      %p218 = por %p216, %p217
      %p219 = scmp.ne.s32.totalorder %s211, %s213
      %p220 = scmp.eq.s32.totalorder %s30, 1
      %p221 = por %p219, %p220
      %p222 = scmp.ne.s32.totalorder %s213, %s214
      %p223 = scmp.eq.s32.totalorder %s30, 0
      %p224 = por %p222, %p223
      %p225 = scmp.ne.s32.totalorder %s213, %s214
      %p226 = scmp.eq.s32.totalorder %s31, 1
      %p227 = por %p225, %p226
      %p229 = scmp.ne.s32.totalorder %s214, %s228
      %p230 = scmp.eq.s32.totalorder %s31, 0
      %p231 = por %p229, %p230
      %s233 = sadd.s32 %s232, 1
      %p236 = scmp.eq.s32.totalorder %s25, 1
      %p237 = scmp.ne.s32.totalorder %s232, %s234
      %p238 = scmp.eq.s32.totalorder %s25, 0
      %p239 = por %p237, %p238
      %p240 = scmp.ne.s32.totalorder %s232, %s234
      %p241 = scmp.eq.s32.totalorder %s30, 1
      %p242 = por %p240, %p241
      %p243 = scmp.ne.s32.totalorder %s234, %s235
      %p244 = scmp.eq.s32.totalorder %s30, 0
      %p245 = por %p243, %p244
      %p246 = scmp.ne.s32.totalorder %s234, %s235
      %p247 = scmp.eq.s32.totalorder %s31, 1
      %p248 = por %p246, %p247
      %p250 = scmp.ne.s32.totalorder %s235, %s249
      %p251 = scmp.eq.s32.totalorder %s31, 0
      %p252 = por %p250, %p251
      %s254 = sadd.s32 %s253, 1
      %p257 = scmp.eq.s32.totalorder %s25, 1
      %p258 = scmp.ne.s32.totalorder %s253, %s255
      %p259 = scmp.eq.s32.totalorder %s25, 0
      %p260 = por %p258, %p259
      %p261 = scmp.ne.s32.totalorder %s253, %s255
      %p262 = scmp.eq.s32.totalorder %s30, 1
      %p263 = por %p261, %p262
      %p264 = scmp.ne.s32.totalorder %s255, %s256
      %p265 = scmp.eq.s32.totalorder %s30, 0
      %p266 = por %p264, %p265
      %p267 = scmp.ne.s32.totalorder %s255, %s256
      %p268 = scmp.eq.s32.totalorder %s31, 1
      %p269 = por %p267, %p268
      %p271 = scmp.ne.s32.totalorder %s256, %s270
      %p272 = scmp.eq.s32.totalorder %s31, 0
      %p273 = por %p271, %p272
      %s275 = sadd.s32 %s274, 1
      %p278 = scmp.eq.s32.totalorder %s25, 1
      %p279 = scmp.ne.s32.totalorder %s274, %s276
      %p280 = scmp.eq.s32.totalorder %s25, 0
      %p281 = por %p279, %p280
      %p282 = scmp.ne.s32.totalorder %s274, %s276
      %p283 = scmp.eq.s32.totalorder %s30, 1
      %p284 = por %p282, %p283
      %p285 = scmp.ne.s32.totalorder %s276, %s277
      %p286 = scmp.eq.s32.totalorder %s30, 0
      %p287 = por %p285, %p286
      %p288 = scmp.ne.s32.totalorder %s276, %s277
      %p289 = scmp.eq.s32.totalorder %s31, 1
      %p290 = por %p288, %p289
      %p292 = scmp.ne.s32.totalorder %s277, %s291
      %p293 = scmp.eq.s32.totalorder %s31, 0
      %p294 = por %p292, %p293
      %s296 = sadd.s32 %s295, 1
      %p299 = scmp.eq.s32.totalorder %s25, 1
      %p300 = scmp.ne.s32.totalorder %s295, %s297
      %p301 = scmp.eq.s32.totalorder %s25, 0
      %p302 = por %p300, %p301
      %p303 = scmp.ne.s32.totalorder %s295, %s297
      %p304 = scmp.eq.s32.totalorder %s30, 1
      %p305 = por %p303, %p304
      %p306 = scmp.ne.s32.totalorder %s297, %s298
      %p307 = scmp.eq.s32.totalorder %s30, 0
      %p308 = por %p306, %p307
      %p309 = scmp.ne.s32.totalorder %s297, %s298
      %p310 = scmp.eq.s32.totalorder %s31, 1
      %p311 = por %p309, %p310
      %p313 = scmp.ne.s32.totalorder %s298, %s312
      %p314 = scmp.eq.s32.totalorder %s31, 0
      %p315 = por %p313, %p314
      %s317 = sadd.s32 %s316, 1
      %p320 = scmp.eq.s32.totalorder %s25, 1
      %p321 = scmp.ne.s32.totalorder %s316, %s318
      %p322 = scmp.eq.s32.totalorder %s25, 0
      %p323 = por %p321, %p322
      %p324 = scmp.ne.s32.totalorder %s316, %s318
      %p325 = scmp.eq.s32.totalorder %s30, 1
      %p326 = por %p324, %p325
      %p327 = scmp.ne.s32.totalorder %s318, %s319
      %p328 = scmp.eq.s32.totalorder %s30, 0
      %p329 = por %p327, %p328
      %p330 = scmp.ne.s32.totalorder %s318, %s319
      %p331 = scmp.eq.s32.totalorder %s31, 1
      %p332 = por %p330, %p331
      %p334 = scmp.ne.s32.totalorder %s319, %s333
      %p335 = scmp.eq.s32.totalorder %s31, 0
      %p336 = por %p334, %p335
      %s337 = ssub.s32 %s25, %s32
      %p338 = scmp.eq.s32.totalorder %s337, 0
      %s340 = sadd.s32 %s339, 1
      %s341 = scalar_select %p338, %s339, %s340
      %p344 = pneg %p338
      %p345 = scmp.eq.s32.totalorder %s25, 1
      %p346 = por %p344, %p345
      %p347 = scmp.ne.s32.totalorder %s339, %s342
      %p348 = scmp.eq.s32.totalorder %s25, 0
      %p349 = por %p347, %p348
      %p350 = scmp.ne.s32.totalorder %s339, %s342
      %p351 = scmp.eq.s32.totalorder %s30, 1
      %p352 = por %p350, %p351
      %p353 = scmp.ne.s32.totalorder %s342, %s343
      %p354 = scmp.eq.s32.totalorder %s30, 0
      %p355 = por %p353, %p354
      %p356 = scmp.ne.s32.totalorder %s342, %s343
      %p357 = scmp.eq.s32.totalorder %s31, 1
      %p358 = por %p356, %p357
      %p360 = scmp.ne.s32.totalorder %s343, %s359
      %p361 = scmp.eq.s32.totalorder %s31, 0
      %p362 = por %p360, %p361
      %p363 = scmp.le.s32.totalorder 1, %s25
      %p364 = scmp.lt.s32.totalorder %s25, 3
      %p365 = pnand %p363, %p364
      %p366 = pneg %p365
      // Predicated region
      $region9: #{tpu_custom_call.1} parent=5 // pred_check
        _
      $region10: #{tpu_custom_call.1} parent=5 // pred_check_branch
        %368 = sbr.rel (%p365) target = $region12
      $region11: #{tpu_custom_call.1} parent=5 // pred_region
        %s369 = ssub.s32 %s25, 1
        // Predicated region
        $region13: #{tpu_custom_call.1} parent=11 // pred_check
          %p370 = pneg %p98
        $region14: #{tpu_custom_call.1} parent=11 // pred_check_branch
          %372 = sbr.rel (%p370) target = $region16
        $region15: #{tpu_custom_call.1} parent=11 // pred_region
          _
        $region16: #{tpu_custom_call.1} parent=11 // pred_fallthru
          _
        // Predicated region
        $region17: #{tpu_custom_call.1} parent=11 // pred_check
          %p373 = pneg %p119
        $region18: #{tpu_custom_call.1} parent=11 // pred_check_branch
          %375 = sbr.rel (%p373) target = $region20
        $region19: #{tpu_custom_call.1} parent=11 // pred_region
          _
        $region20: #{tpu_custom_call.1} parent=11 // pred_fallthru
          _
        // Predicated region
        $region21: #{tpu_custom_call.1} parent=11 // pred_check
          %p376 = pneg %p140
        $region22: #{tpu_custom_call.1} parent=11 // pred_check_branch
          %378 = sbr.rel (%p376) target = $region24
        $region23: #{tpu_custom_call.1} parent=11 // pred_region
          %380 = vsyncadd [#allocation4], 0
          %s381 = sshll.u32 %s4, 4
          %s382 = int_to_ptr.hbm [resolvable:$true] %s381
          %s383 = sshll.u32 [#allocation3], 4
          %s384 = int_to_ptr.vmem [resolvable:$true] %s383
          %389 = dma.hbm_to_vmem [thread:$0]  %s382, 256, %s384, [#allocation4], 64, 64, 4
        $region24: #{tpu_custom_call.1} parent=11 // pred_fallthru
          _
        // Predicated region
        $region25: #{tpu_custom_call.1} parent=11 // pred_check
          %p390 = pneg %p161
        $region26: #{tpu_custom_call.1} parent=11 // pred_check_branch
          %392 = sbr.rel (%p390) target = $region28
        $region27: #{tpu_custom_call.1} parent=11 // pred_region
          _
        $region28: #{tpu_custom_call.1} parent=11 // pred_fallthru
          _
        // Predicated region
        $region29: #{tpu_custom_call.1} parent=11 // pred_check
          %p393 = pneg %p182
        $region30: #{tpu_custom_call.1} parent=11 // pred_check_branch
          %395 = sbr.rel (%p393) target = $region32
        $region31: #{tpu_custom_call.1} parent=11 // pred_region
          _
        $region32: #{tpu_custom_call.1} parent=11 // pred_fallthru
          _
        // Predicated region
        $region33: #{tpu_custom_call.1} parent=11 // pred_check
          %p396 = pneg %p203
        $region34: #{tpu_custom_call.1} parent=11 // pred_check_branch
          %398 = sbr.rel (%p396) target = $region36
        $region35: #{tpu_custom_call.1} parent=11 // pred_region
          _
        $region36: #{tpu_custom_call.1} parent=11 // pred_fallthru
          _
        // Predicated region
        $region37: #{tpu_custom_call.1} parent=11 // pred_check
          %p399 = pneg %p224
        $region38: #{tpu_custom_call.1} parent=11 // pred_check_branch
          %401 = sbr.rel (%p399) target = $region40
        $region39: #{tpu_custom_call.1} parent=11 // pred_region
          %403 = vsyncadd [#allocation7], 0
          %s404 = sshll.u32 %s8, 4
          %s405 = int_to_ptr.hbm [resolvable:$true] %s404
          %s406 = sshll.u32 [#allocation6], 4
          %s407 = int_to_ptr.vmem [resolvable:$true] %s406
          %412 = dma.hbm_to_vmem [thread:$0]  %s405, 256, %s407, [#allocation7], 64, 64, 4
        $region40: #{tpu_custom_call.1} parent=11 // pred_fallthru
          _
        // Predicated region
        $region41: #{tpu_custom_call.1} parent=11 // pred_check
          %p413 = pneg %p245
        $region42: #{tpu_custom_call.1} parent=11 // pred_check_branch
          %415 = sbr.rel (%p413) target = $region44
        $region43: #{tpu_custom_call.1} parent=11 // pred_region
          _
        $region44: #{tpu_custom_call.1} parent=11 // pred_fallthru
          _
        // Predicated region
        $region45: #{tpu_custom_call.1} parent=11 // pred_check
          %p416 = pneg %p266
        $region46: #{tpu_custom_call.1} parent=11 // pred_check_branch
          %418 = sbr.rel (%p416) target = $region48
        $region47: #{tpu_custom_call.1} parent=11 // pred_region
          _
        $region48: #{tpu_custom_call.1} parent=11 // pred_fallthru
          _
        // Predicated region
        $region49: #{tpu_custom_call.1} parent=11 // pred_check
          %p419 = pneg %p287
        $region50: #{tpu_custom_call.1} parent=11 // pred_check_branch
          %421 = sbr.rel (%p419) target = $region52
        $region51: #{tpu_custom_call.1} parent=11 // pred_region
          _
        $region52: #{tpu_custom_call.1} parent=11 // pred_fallthru
          _
        // Predicated region
        $region53: #{tpu_custom_call.1} parent=11 // pred_check
          %p422 = pneg %p308
        $region54: #{tpu_custom_call.1} parent=11 // pred_check_branch
          %424 = sbr.rel (%p422) target = $region56
        $region55: #{tpu_custom_call.1} parent=11 // pred_region
          _
        $region56: #{tpu_custom_call.1} parent=11 // pred_fallthru
          _
        // Predicated region
        $region57: #{tpu_custom_call.1} parent=11 // pred_check
          %p425 = pneg %p329
        $region58: #{tpu_custom_call.1} parent=11 // pred_check_branch
          %427 = sbr.rel (%p425) target = $region60
        $region59: #{tpu_custom_call.1} parent=11 // pred_region
          _
        $region60: #{tpu_custom_call.1} parent=11 // pred_fallthru
          _
      $region12: #{tpu_custom_call.1} parent=5 // pred_fallthru
        _
      %p428 = scmp.lt.s32.totalorder %s25, 2
      // Predicated region
      $region61: #{tpu_custom_call.1} parent=5 // pred_check
        %p429 = pneg %p428
      $region62: #{tpu_custom_call.1} parent=5 // pred_check_branch
        %431 = sbr.rel (%p429) target = $region64
      $region63: #{tpu_custom_call.1} parent=5 // pred_region
        // Predicated region
        $region65: #{tpu_custom_call.1} parent=63 // pred_check
          %p432 = pneg %p45
        $region66: #{tpu_custom_call.1} parent=63 // pred_check_branch
          %434 = sbr.rel (%p432) target = $region68
        $region67: #{tpu_custom_call.1} parent=63 // pred_region
          %p435 = scmp.lt.s32.totalorder %s25, 1
          %s436 = scalar_select %p435, %s25, 1
          %s437 = smul.addr %s436, 8
          %s438 = scalar_lea.vmem %s0, %s437
        $region68: #{tpu_custom_call.1} parent=63 // pred_fallthru
          _
        // Predicated region
        $region69: #{tpu_custom_call.1} parent=63 // pred_check
          %p439 = pneg %p71
        $region70: #{tpu_custom_call.1} parent=63 // pred_check_branch
          %441 = sbr.rel (%p439) target = $region72
        $region71: #{tpu_custom_call.1} parent=63 // pred_region
          %p442 = scmp.lt.s32.totalorder %s25, 1
          %s443 = scalar_select %p442, %s25, 1
          %s444 = smul.addr %s443, 8
          %s445 = scalar_lea.vmem %s1, %s444
        $region72: #{tpu_custom_call.1} parent=63 // pred_fallthru
          _
      $region64: #{tpu_custom_call.1} parent=5 // pred_fallthru
        _
      %p446 = scmp.le.s32.totalorder 1, %s25
      %p447 = scmp.lt.s32.totalorder %s25, 3
      %p448 = pnand %p446, %p447
      %p449 = pneg %p448
      // Predicated region
      $region73: #{tpu_custom_call.1} parent=5 // pred_check
        _
      $region74: #{tpu_custom_call.1} parent=5 // pred_check_branch
        %451 = sbr.rel (%p448) target = $region76
      $region75: #{tpu_custom_call.1} parent=5 // pred_region
        %s452 = ssub.s32 %s25, 1
        // Predicated region
        $region77: #{tpu_custom_call.1} parent=75 // pred_check
          %p453 = pneg %p140
        $region78: #{tpu_custom_call.1} parent=75 // pred_check_branch
          %455 = sbr.rel (%p453) target = $region80
        $region79: #{tpu_custom_call.1} parent=75 // pred_region
          %457 = dma.done [#allocation4], 256
        $region80: #{tpu_custom_call.1} parent=75 // pred_fallthru
          _
        // Predicated region
        $region81: #{tpu_custom_call.1} parent=75 // pred_check
          %p458 = pneg %p224
        $region82: #{tpu_custom_call.1} parent=75 // pred_check_branch
          %460 = sbr.rel (%p458) target = $region84
        $region83: #{tpu_custom_call.1} parent=75 // pred_region
          %462 = dma.done [#allocation7], 256
        $region84: #{tpu_custom_call.1} parent=75 // pred_fallthru
          _
        %p463 = scmp.lt.s32.totalorder %s30, 1
        %s464 = scalar_select %p463, %s30, 1
        %s465 = smul.addr %s464, 8
        %s466 = scalar_lea.vmem %s0, %s465
        %p467 = pneg %p51
        %p468 = pneg %p48
        %p469 = scmp.lt.s32.totalorder %s30, 1
        %s470 = scalar_select %p469, %s30, 1
        %s471 = smul.addr %s470, 8
        %s472 = scalar_lea.vmem %s1, %s471
        %p473 = pneg %p77
        %p474 = pneg %p74
        %p475 = pneg %p98
        %p476 = pneg %p95
        %p477 = pneg %p119
        %p478 = pneg %p116
        %p479 = pneg %p140
        %p480 = pneg %p137
        %p481 = pneg %p161
        %p482 = pneg %p158
        %p483 = pneg %p182
        %p484 = pneg %p179
        %p485 = pneg %p203
        %p486 = pneg %p200
        %p487 = pneg %p224
        %p488 = pneg %p221
        %p489 = pneg %p245
        %p490 = pneg %p242
        %p491 = pneg %p266
        %p492 = pneg %p263
        %p493 = pneg %p287
        %p494 = pneg %p284
        %p495 = pneg %p308
        %p496 = pneg %p305
        %p497 = pneg %p329
        %p498 = pneg %p326
        %p499 = pneg %p355
        %p500 = pneg %p352
        %s501 = sand.u32 %s342, 1
        %s502 = scalar_lea.sflag [#allocation5], %s501
        %s503 = sand.u32 %s342, 1
        %s504 = smul.addr %s503, 8
        %s505 = scalar_lea.vmem [#allocation8], %s504
        %p506 = scmp.lt.s32.totalorder %s30, 1
        %s507 = scalar_select %p506, %s30, 1
        %s508 = smul.addr %s507, 8
        %s509 = scalar_lea.vmem %s0, %s508
        %p510 = scmp.lt.s32.totalorder %s30, 1
        %s511 = scalar_select %p510, %s30, 1
        %s512 = smul.addr %s511, 8
        %s513 = scalar_lea.vmem %s1, %s512
        %v515 = vld [vmem:[%s509] sm:$0xff]
        %v516 = vld [vmem:[%s513] sm:$0xff]
        %v517 = vpack.c.bf16 %v515, %v515
        %v518 = vld [vmem:[%s2] sm:$0xf]
        %v519 = vld [vmem:[%s2 + $0x4] sm:$0xf]
        %v520 = vld [vmem:[%s2 + $0x8] sm:$0xf]
        %v521 = vld [vmem:[%s2 + $0xc] sm:$0xf]
        %v522 = vld [vmem:[%s3] sm:$0x1]
        %v524 = vperm.slane %v522, 0
        %v530 = vunpack.c.l.b16 %v518
        %v531 = vunpack.c.l.b16 %v519
        %v532 = vunpack.c.l.b16 %v520
        %v533 = vunpack.c.l.b16 %v521
        %v534 = vpack.c.b16 %v531, %v530
        %v535 = vpack.c.b16 %v533, %v532
        %vm538 = vcmask 261120
        %v540 = vsel %vm538, %v517, 0
        %542 = vmatpush.bf16.msra.mxu0 0
        %543 = vmatpush.bf16.msra.mxu0 0
        %544 = vmatpush.bf16.msra.mxu0 0
        %545 = vmatpush.bf16.msra.mxu0 0
        %546 = vmatpush.bf16.msra.mxu0 0
        %547 = vmatpush.bf16.msra.mxu0 0
        %548 = vmatpush.bf16.msra.mxu0 %v535
        %549 = vmatpush.bf16.msra.mxu0 %v534
        %550 = vmatmul.bf16.gmra.mxu0 %v540
        %v551 = vpop.f32.mrf.mxu0
        %v552 = vadd.f32 %v524, %v551
        %v553 = vpop.f32.mrf.mxu0
        %554 = vdwg.mxu0
        %v555 = vpack.c.bf16 %v552, %v552
        %v557 = vunpack.c.l.b16 %v555
        %v558 = vpack.c.b16 %v557, %v557
        %559 = vrot.lane.b32.xlu0 %v558, 96
        %v560 = vpop.permute.xlu0 %559
        %vm561 = vcmask 64512
        %v563 = vsel %vm561, %v555, 0
        %v566 = vsel %vm561, %v560, 0
        %568 = vmatpush.bf16.xpose.msra.mxu0 0
        %569 = vmatpush.bf16.xpose.msra.mxu0 0
        %570 = vmatpush.bf16.xpose.msra.mxu0 0
        %571 = vmatpush.bf16.xpose.msra.mxu0 0
        %572 = vmatpush.bf16.xpose.msra.mxu0 0
        %573 = vmatpush.bf16.xpose.msra.mxu0 0
        %574 = vmatpush.bf16.xpose.msra.mxu0 0
        %575 = vmatpush.bf16.xpose.msra.mxu0 %v566
        %576 = vmatmul.bf16.gmra.mxu0 %v563
        %v577 = vpop.f32.mrf.mxu0
        %v578 = vadd.f32 %v516, %v577
        %v579 = vpop.f32.mrf.mxu0
        %580 = vdwg.mxu0
        %v581 = vsel %vm561, %v578, -inf
        %582 = vmax.xlane.f32.xlu0 %v581
        %v583 = vpop.xlane.xlu0 %582
        %v584 = vsub.f32 %v578, %v583
        %v585 = vmul.f32 %v584, 1.442695
        %v586 = vpow.pop %v585
        %v587 = vsel %vm561, %v586, 0.0
        %588 = vadd.xlane.f32.xlu0 %v587
        %v589 = vpop.xlane.xlu0 %588
        %v590 = vrcp.pop %v589
        %v591 = vmul.f32 %v586, %v590
        %v592 = vpack.c.bf16 %v591, %v591
        %593 = vrot.lane.b32.xlu0 %v558, 64
        %v594 = vpop.permute.xlu0 %593
        %v596 = vsel %vm561, %v592, 0
        %vm598 = vcmask 1043456
        %v600 = vsel %vm598, %v594, 0
        %602 = vmatpush.bf16.msra.mxu0 0
        %603 = vmatpush.bf16.msra.mxu0 0
        %604 = vmatpush.bf16.msra.mxu0 0
        %605 = vmatpush.bf16.msra.mxu0 0
        %606 = vmatpush.bf16.msra.mxu0 0
        %607 = vmatpush.bf16.msra.mxu0 0
        %608 = vmatpush.bf16.msra.mxu0 0
        %609 = vmatpush.bf16.msra.mxu0 %v600
        %610 = vmatmul.bf16.gmra.mxu0 %v596
        %v611 = vpop.f32.mrf.mxu0
        %v612 = vadd.f32 0.0, %v611
        %v613 = vpop.f32.mrf.mxu0
        %614 = vdwg.mxu0
        %615 = vst.msk [vmem:[#allocation2] sm:$0xff] %vm561, %v612
        %616 = vrot.lane.b32.xlu0 %v558, 120
        %v617 = vpop.permute.xlu0 %616
        %618 = vrot.lane.b32.xlu0 %v558, 88
        %v619 = vpop.permute.xlu0 %618
        %v621 = vsel %vm561, %v617, 0
        %v624 = vsel %vm561, %v619, 0
        %626 = vmatpush.bf16.xpose.msra.mxu0 0
        %627 = vmatpush.bf16.xpose.msra.mxu0 0
        %628 = vmatpush.bf16.xpose.msra.mxu0 0
        %629 = vmatpush.bf16.xpose.msra.mxu0 0
        %630 = vmatpush.bf16.xpose.msra.mxu0 0
        %631 = vmatpush.bf16.xpose.msra.mxu0 0
        %632 = vmatpush.bf16.xpose.msra.mxu0 0
        %633 = vmatpush.bf16.xpose.msra.mxu0 %v624
        %634 = vmatmul.bf16.gmra.mxu0 %v621
        %v635 = vpop.f32.mrf.mxu0
        %v636 = vadd.f32 %v516, %v635
        %v637 = vpop.f32.mrf.mxu0
        %638 = vdwg.mxu0
        %v639 = vsel %vm561, %v636, -inf
        %640 = vmax.xlane.f32.xlu0 %v639
        %v641 = vpop.xlane.xlu0 %640
        %v642 = vsub.f32 %v636, %v641
        %v643 = vmul.f32 %v642, 1.442695
        %v644 = vpow.pop %v643
        %v645 = vsel %vm561, %v644, 0.0
        %646 = vadd.xlane.f32.xlu0 %v645
        %v647 = vpop.xlane.xlu0 %646
        %v648 = vrcp.pop %v647
        %v649 = vmul.f32 %v644, %v648
        %v650 = vpack.c.bf16 %v649, %v649
        %651 = vrot.lane.b32.xlu0 %v558, 56
        %v652 = vpop.permute.xlu0 %651
        %v654 = vsel %vm561, %v650, 0
        %v657 = vsel %vm598, %v652, 0
        %659 = vmatpush.bf16.msra.mxu0 0
        %660 = vmatpush.bf16.msra.mxu0 0
        %661 = vmatpush.bf16.msra.mxu0 0
        %662 = vmatpush.bf16.msra.mxu0 0
        %663 = vmatpush.bf16.msra.mxu0 0
        %664 = vmatpush.bf16.msra.mxu0 0
        %665 = vmatpush.bf16.msra.mxu0 0
        %666 = vmatpush.bf16.msra.mxu0 %v657
        %667 = vmatmul.bf16.gmra.mxu0 %v654
        %v668 = vpop.f32.mrf.mxu0
        %v669 = vadd.f32 0.0, %v668
        %v670 = vpop.f32.mrf.mxu0
        %671 = vdwg.mxu0
        %673 = vrot.lane.b32.xlu0 %v669, 8
        %v674 = vpop.permute.xlu0 %673
        %vm676 = vcmask 130112
        %677 = vst.msk [vmem:[#allocation2] sm:$0xff] %vm676, %v674
        %678 = vrot.lane.b32.xlu0 %v558, 112
        %v679 = vpop.permute.xlu0 %678
        %680 = vrot.lane.b32.xlu0 %v558, 80
        %v681 = vpop.permute.xlu0 %680
        %v683 = vsel %vm561, %v679, 0
        %v686 = vsel %vm561, %v681, 0
        %688 = vmatpush.bf16.xpose.msra.mxu0 0
        %689 = vmatpush.bf16.xpose.msra.mxu0 0
        %690 = vmatpush.bf16.xpose.msra.mxu0 0
        %691 = vmatpush.bf16.xpose.msra.mxu0 0
        %692 = vmatpush.bf16.xpose.msra.mxu0 0
        %693 = vmatpush.bf16.xpose.msra.mxu0 0
        %694 = vmatpush.bf16.xpose.msra.mxu0 0
        %695 = vmatpush.bf16.xpose.msra.mxu0 %v686
        %696 = vmatmul.bf16.gmra.mxu0 %v683
        %v697 = vpop.f32.mrf.mxu0
        %v698 = vadd.f32 %v516, %v697
        %v699 = vpop.f32.mrf.mxu0
        %700 = vdwg.mxu0
        %v701 = vsel %vm561, %v698, -inf
        %702 = vmax.xlane.f32.xlu0 %v701
        %v703 = vpop.xlane.xlu0 %702
        %v704 = vsub.f32 %v698, %v703
        %v705 = vmul.f32 %v704, 1.442695
        %v706 = vpow.pop %v705
        %v707 = vsel %vm561, %v706, 0.0
        %708 = vadd.xlane.f32.xlu0 %v707
        %v709 = vpop.xlane.xlu0 %708
        %v710 = vrcp.pop %v709
        %v711 = vmul.f32 %v706, %v710
        %v712 = vpack.c.bf16 %v711, %v711
        %713 = vrot.lane.b32.xlu0 %v558, 48
        %v714 = vpop.permute.xlu0 %713
        %v716 = vsel %vm561, %v712, 0
        %v719 = vsel %vm598, %v714, 0
        %721 = vmatpush.bf16.msra.mxu0 0
        %722 = vmatpush.bf16.msra.mxu0 0
        %723 = vmatpush.bf16.msra.mxu0 0
        %724 = vmatpush.bf16.msra.mxu0 0
        %725 = vmatpush.bf16.msra.mxu0 0
        %726 = vmatpush.bf16.msra.mxu0 0
        %727 = vmatpush.bf16.msra.mxu0 0
        %728 = vmatpush.bf16.msra.mxu0 %v719
        %729 = vmatmul.bf16.gmra.mxu0 %v716
        %v730 = vpop.f32.mrf.mxu0
        %v731 = vadd.f32 0.0, %v730
        %v732 = vpop.f32.mrf.mxu0
        %733 = vdwg.mxu0
        %735 = vrot.lane.b32.xlu0 %v731, 16
        %v736 = vpop.permute.xlu0 %735
        %vm738 = vcmask 195712
        %739 = vst.msk [vmem:[#allocation2] sm:$0xff] %vm738, %v736
        %740 = vrot.lane.b32.xlu0 %v558, 104
        %v741 = vpop.permute.xlu0 %740
        %742 = vrot.lane.b32.xlu0 %v558, 72
        %v743 = vpop.permute.xlu0 %742
        %v745 = vsel %vm561, %v741, 0
        %v748 = vsel %vm561, %v743, 0
        %750 = vmatpush.bf16.xpose.msra.mxu0 0
        %751 = vmatpush.bf16.xpose.msra.mxu0 0
        %752 = vmatpush.bf16.xpose.msra.mxu0 0
        %753 = vmatpush.bf16.xpose.msra.mxu0 0
        %754 = vmatpush.bf16.xpose.msra.mxu0 0
        %755 = vmatpush.bf16.xpose.msra.mxu0 0
        %756 = vmatpush.bf16.xpose.msra.mxu0 0
        %757 = vmatpush.bf16.xpose.msra.mxu0 %v748
        %758 = vmatmul.bf16.gmra.mxu0 %v745
        %v759 = vpop.f32.mrf.mxu0
        %v760 = vadd.f32 %v516, %v759
        %v761 = vpop.f32.mrf.mxu0
        %762 = vdwg.mxu0
        %v763 = vsel %vm561, %v760, -inf
        %764 = vmax.xlane.f32.xlu0 %v763
        %v765 = vpop.xlane.xlu0 %764
        %v766 = vsub.f32 %v760, %v765
        %v767 = vmul.f32 %v766, 1.442695
        %v768 = vpow.pop %v767
        %v769 = vsel %vm561, %v768, 0.0
        %770 = vadd.xlane.f32.xlu0 %v769
        %v771 = vpop.xlane.xlu0 %770
        %v772 = vrcp.pop %v771
        %v773 = vmul.f32 %v768, %v772
        %v774 = vpack.c.bf16 %v773, %v773
        %775 = vrot.lane.b32.xlu0 %v558, 40
        %v776 = vpop.permute.xlu0 %775
        %v778 = vsel %vm561, %v774, 0
        %v781 = vsel %vm598, %v776, 0
        %783 = vmatpush.bf16.msra.mxu0 0
        %784 = vmatpush.bf16.msra.mxu0 0
        %785 = vmatpush.bf16.msra.mxu0 0
        %786 = vmatpush.bf16.msra.mxu0 0
        %787 = vmatpush.bf16.msra.mxu0 0
        %788 = vmatpush.bf16.msra.mxu0 0
        %789 = vmatpush.bf16.msra.mxu0 0
        %790 = vmatpush.bf16.msra.mxu0 %v781
        %791 = vmatmul.bf16.gmra.mxu0 %v778
        %v792 = vpop.f32.mrf.mxu0
        %v793 = vadd.f32 0.0, %v792
        %v794 = vpop.f32.mrf.mxu0
        %795 = vdwg.mxu0
        %797 = vrot.lane.b32.xlu0 %v793, 24
        %v798 = vpop.permute.xlu0 %797
        %vm800 = vcmask 261312
        %801 = vst.msk [vmem:[#allocation2] sm:$0xff] %vm800, %v798
        %v802 = vld [vmem:[#allocation2] sm:$0xff]
        %v803 = vpack.c.bf16 %v802, %v802
        %v804 = vld [vmem:[#allocation3] sm:$0xf]
        %v805 = vld [vmem:[#allocation3 + $0x4] sm:$0xf]
        %v806 = vld [vmem:[#allocation3 + $0x8] sm:$0xf]
        %v807 = vld [vmem:[#allocation3 + $0xc] sm:$0xf]
        %v808 = vld [vmem:[%s5] sm:$0x1]
        %v810 = vperm.slane %v808, 0
        %v816 = vunpack.c.l.b16 %v804
        %v817 = vunpack.c.l.b16 %v805
        %v818 = vunpack.c.l.b16 %v806
        %v819 = vunpack.c.l.b16 %v807
        %v820 = vpack.c.b16 %v817, %v816
        %v821 = vpack.c.b16 %v819, %v818
        %v825 = vsel %vm538, %v803, 0
        %827 = vmatpush.bf16.msra.mxu0 0
        %828 = vmatpush.bf16.msra.mxu0 0
        %829 = vmatpush.bf16.msra.mxu0 0
        %830 = vmatpush.bf16.msra.mxu0 0
        %831 = vmatpush.bf16.msra.mxu0 0
        %832 = vmatpush.bf16.msra.mxu0 0
        %833 = vmatpush.bf16.msra.mxu0 %v821
        %834 = vmatpush.bf16.msra.mxu0 %v820
        %835 = vmatmul.bf16.gmra.mxu0 %v825
        %v836 = vpop.f32.mrf.mxu0
        %v837 = vadd.f32 %v810, %v836
        %v838 = vpop.f32.mrf.mxu0
        %839 = vdwg.mxu0
        %v840 = vadd.f32 %v515, %v837
        %v841 = vld [vmem:[%s6] sm:$0x1]
        %v842 = vld [vmem:[%s7] sm:$0x1]
        %v843 = vsel %vm538, %v840, 0.0
        %844 = vadd.xlane.f32.xlu0 %v843
        %v845 = vpop.xlane.xlu0 %844
        %v846 = vrcp.pop 32.0
        %v847 = vmul.f32 32.0, %v846
        %v848 = vsub.f32 1.0, %v847
        %v849 = vmul.f32 %v846, %v848
        %v850 = vadd.f32 %v846, %v849
        %vm851 = vweird.f32 %v846
        %v852 = vsel %vm851, %v846, %v850
        %v853 = vmul.f32 %v845, %v852
        %v854 = vsub.f32 %v840, %v853
        %v855 = vmul.f32 %v854, %v854
        %v856 = vsel %vm538, %v855, 0.0
        %857 = vadd.xlane.f32.xlu0 %v856
        %v858 = vpop.xlane.xlu0 %857
        %v859 = vmul.f32 %v858, %v852
        %v860 = vadd.f32 %v859, 1e-05
        %v861 = vrsqrt.pop %v860
        %v862 = vmul.f32 %v861, %v860
        %v863 = vmul.f32 %v862, %v861
        %v864 = vmul.f32 0.5, %v863
        %v865 = vsub.f32 1.5, %v864
        %v866 = vmul.f32 %v861, %v865
        %vm867 = vweird.f32 %v860
        %vm868 = vweird.f32 %v861
        %vm869 = vmor %vm867, %vm868
        %v870 = vsel %vm869, %v861, %v866
        %v871 = vmul.f32 %v854, %v870
        %v873 = vperm.slane %v841, 0
        %v875 = vmul.f32 %v871, %v873
        %v877 = vperm.slane %v842, 0
        %v879 = vadd.f32 %v875, %v877
        %v880 = vpack.c.bf16 %v879, %v879
        %v881 = vld [vmem:[#allocation6] sm:$0xf]
        %v882 = vld [vmem:[#allocation6 + $0x4] sm:$0xf]
        %v883 = vld [vmem:[#allocation6 + $0x8] sm:$0xf]
        %v884 = vld [vmem:[#allocation6 + $0xc] sm:$0xf]
        %v885 = vld [vmem:[%s9] sm:$0x1]
        %v887 = vperm.slane %v885, 0
        %v893 = vunpack.c.l.b16 %v881
        %v894 = vunpack.c.l.b16 %v882
        %v895 = vunpack.c.l.b16 %v883
        %v896 = vunpack.c.l.b16 %v884
        %v897 = vpack.c.b16 %v894, %v893
        %v898 = vpack.c.b16 %v896, %v895
        %v902 = vsel %vm538, %v880, 0
        %904 = vmatpush.bf16.msra.mxu0 0
        %905 = vmatpush.bf16.msra.mxu0 0
        %906 = vmatpush.bf16.msra.mxu0 0
        %907 = vmatpush.bf16.msra.mxu0 0
        %908 = vmatpush.bf16.msra.mxu0 0
        %909 = vmatpush.bf16.msra.mxu0 0
        %910 = vmatpush.bf16.msra.mxu0 %v898
        %911 = vmatpush.bf16.msra.mxu0 %v897
        %912 = vmatmul.bf16.gmra.mxu0 %v902
        %v913 = vpop.f32.mrf.mxu0
        %v914 = vadd.f32 %v887, %v913
        %v915 = vpop.f32.mrf.mxu0
        %916 = vdwg.mxu0
        %v917 = vmax.f32 %v914, 0.0
        %v918 = vpack.c.bf16 %v917, %v917
        %v919 = vld [vmem:[%s10] sm:$0xf]
        %v920 = vld [vmem:[%s10 + $0x4] sm:$0xf]
        %v921 = vld [vmem:[%s10 + $0x8] sm:$0xf]
        %v922 = vld [vmem:[%s10 + $0xc] sm:$0xf]
        %v923 = vld [vmem:[%s10 + $0x10] sm:$0xf]
        %v924 = vld [vmem:[%s10 + $0x14] sm:$0xf]
        %v925 = vld [vmem:[%s10 + $0x18] sm:$0xf]
        %v926 = vld [vmem:[%s10 + $0x1c] sm:$0xf]
        %v927 = vld [vmem:[%s11] sm:$0x1]
        %v929 = vperm.slane %v927, 0
        %v939 = vunpack.c.l.b16 %v919
        %v940 = vunpack.c.l.b16 %v920
        %v941 = vunpack.c.l.b16 %v921
        %v942 = vunpack.c.l.b16 %v922
        %v943 = vunpack.c.l.b16 %v923
        %v944 = vunpack.c.l.b16 %v924
        %v945 = vunpack.c.l.b16 %v925
        %v946 = vunpack.c.l.b16 %v926
        %v947 = vpack.c.b16 %v940, %v939
        %v948 = vpack.c.b16 %v942, %v941
        %v949 = vpack.c.b16 %v944, %v943
        %v950 = vpack.c.b16 %v946, %v945
        %vm955 = vcmask 523264
        %v957 = vsel %vm955, %v918, 0
        %959 = vmatpush.bf16.msra.mxu0 0
        %960 = vmatpush.bf16.msra.mxu0 0
        %961 = vmatpush.bf16.msra.mxu0 0
        %962 = vmatpush.bf16.msra.mxu0 0
        %963 = vmatpush.bf16.msra.mxu0 %v950
        %964 = vmatpush.bf16.msra.mxu0 %v949
        %965 = vmatpush.bf16.msra.mxu0 %v948
        %966 = vmatpush.bf16.msra.mxu0 %v947
        %967 = vmatmul.bf16.gmra.mxu0 %v957
        %v968 = vpop.f32.mrf.mxu0
        %v969 = vadd.f32 %v929, %v968
        %v970 = vpop.f32.mrf.mxu0
        %971 = vdwg.mxu0
        %v972 = vadd.f32 %v879, %v969
        %v973 = vld [vmem:[%s12] sm:$0x1]
        %v974 = vld [vmem:[%s13] sm:$0x1]
        %v975 = vsel %vm538, %v972, 0.0
        %976 = vadd.xlane.f32.xlu0 %v975
        %v977 = vpop.xlane.xlu0 %976
        %v978 = vmul.f32 %v977, %v852
        %v979 = vsub.f32 %v972, %v978
        %v980 = vmul.f32 %v979, %v979
        %v981 = vsel %vm538, %v980, 0.0
        %982 = vadd.xlane.f32.xlu0 %v981
        %v983 = vpop.xlane.xlu0 %982
        %v984 = vmul.f32 %v983, %v852
        %v985 = vadd.f32 %v984, 1e-05
        %v986 = vrsqrt.pop %v985
        %v987 = vmul.f32 %v986, %v985
        %v988 = vmul.f32 %v987, %v986
        %v989 = vmul.f32 0.5, %v988
        %v990 = vsub.f32 1.5, %v989
        %v991 = vmul.f32 %v986, %v990
        %vm992 = vweird.f32 %v985
        %vm993 = vweird.f32 %v986
        %vm994 = vmor %vm992, %vm993
        %v995 = vsel %vm994, %v986, %v991
        %v996 = vmul.f32 %v979, %v995
        %v998 = vperm.slane %v973, 0
        %v1000 = vmul.f32 %v996, %v998
        %v1002 = vperm.slane %v974, 0
        %v1004 = vadd.f32 %v1000, %v1002
        %1005 = vst.msk [vmem:[%s505] sm:$0xff] %vm538, %v1004
        %s1006 = sand.u32 %s342, 1
        %s1007 = scalar_lea.sflag [#allocation5], %s1006
        %s1008 = sand.u32 %s342, 1
        %s1009 = smul.addr %s1008, 8
        %s1010 = scalar_lea.vmem [#allocation8], %s1009
        // Predicated region
        $region85: #{tpu_custom_call.1} parent=75 // pred_check
          %p1011 = pneg %p352
        $region86: #{tpu_custom_call.1} parent=75 // pred_check_branch
          %1013 = sbr.rel (%p1011) target = $region88
        $region87: #{tpu_custom_call.1} parent=75 // pred_region
          %1015 = vsyncadd %s1007, 0
          %s1016 = smul.addr %s30, 8
          %s1017 = scalar_lea.hbm %s14, %s1016
          %s1019 = sshll.u32 %s1010, 4
          %s1020 = int_to_ptr.vmem [resolvable:$true] %s1019
          %s1021 = sshll.u32 %s1017, 4
          %s1022 = int_to_ptr.hbm [resolvable:$true] %s1021
          %1024 = dma.vmem_to_hbm [thread:$0]  %s1020, 128, %s1022, %s1007
        $region88: #{tpu_custom_call.1} parent=75 // pred_fallthru
          _
      $region76: #{tpu_custom_call.1} parent=5 // pred_fallthru
        _
      %p1025 = scmp.le.s32.totalorder 2, %s25
      // Predicated region
      $region89: #{tpu_custom_call.1} parent=5 // pred_check
        %p1026 = pneg %p1025
      $region90: #{tpu_custom_call.1} parent=5 // pred_check_branch
        %1028 = sbr.rel (%p1026) target = $region92
      $region91: #{tpu_custom_call.1} parent=5 // pred_region
        %s1029 = ssub.s32 %s25, 2
        // Predicated region
        $region93: #{tpu_custom_call.1} parent=91 // pred_check
          %p1030 = pneg %p358
        $region94: #{tpu_custom_call.1} parent=91 // pred_check_branch
          %1032 = sbr.rel (%p1030) target = $region96
        $region95: #{tpu_custom_call.1} parent=91 // pred_region
          %s1033 = sand.u32 %s343, 1
          %s1034 = scalar_lea.sflag [#allocation5], %s1033
          %s1035 = sand.u32 %s343, 1
          %s1036 = smul.addr %s1035, 8
          %s1037 = scalar_lea.vmem [#allocation8], %s1036
          %1039 = dma.done %s1034, 128
        $region96: #{tpu_custom_call.1} parent=91 // pred_fallthru
          _
      $region92: #{tpu_custom_call.1} parent=5 // pred_fallthru
        _
    $region6: #{tpu_custom_call.1} parent=1 // loop_footer
      %s29 = sadd.s32 1, %s25
    $region7: #{tpu_custom_call.1} parent=1 // loop_footer_branch
      %24 = sbr.rel target = $region3
    $region8: #{tpu_custom_call.1} parent=1 // loop_exit
      _
    %1040 = vsyncpa [#allocation4], 1
    %s1041 = scalar_lea.sflag [#allocation4], 1
    %1042 = vsyncpa %s1041, 1
    %1043 = vsyncpa [#allocation7], 1
    %1044 = vsyncpa [#allocation5], 1
    %s1045 = scalar_lea.sflag [#allocation5], 1
    %1046 = vsyncpa %s1045, 1

</llo_original>
